<compile_context>
chip_gen: v6e
topology: v6e:2x2x1
jax: 0.10.0
libtpu: 0.0.40
codegen_flags: <defaults>
</compile_context>

<pallas_src>
import functools
import math

import jax
import jax.numpy as jnp
from jax.experimental import pallas as pl
from jax.experimental.pallas import tpu as pltpu


def _gaussian_taps_1d(kernel_size: int, sigma: float):
    """1-D taps whose outer product equals the module's 2-D kernel (sum == 2)."""
    m = (kernel_size - 1) / 2.0
    g = [math.exp(-((i - m) ** 2) / (2.0 * sigma * sigma)) for i in range(kernel_size)]
    s = sum(g)
    scale = math.sqrt(2.0) / s          # outer(taps, taps) sums to exactly 2
    return tuple(float(v * scale) for v in g)


def _dilate_blur_kernel(x_ref, out_ref, rows_ref, cols_ref, *, taps, H, W, K, pad):
    """One grid step processes Pb channel planes.

    x_ref    : (Pb, H, W)          raw (unpadded, un-inverted) input planes
    out_ref  : (Pb, H, W)
    rows_ref : (Pb, H + 2*pad, W)  scratch: row-replicate-padded input
    cols_ref : (Pb, H, W + 2*pad)  scratch: col-replicate-padded vertical pass
    """
    # ---- replicate padding (rows) built in VMEM: no wrapper-side pad ----
    rows_ref[:, pad:pad + H, :] = x_ref[...].astype(jnp.float32)
    for r in range(pad):
        rows_ref[:, r:r + 1, :] = x_ref[:, 0:1, :].astype(jnp.float32)
        rows_ref[:, pad + H + r:pad + H + r + 1, :] = x_ref[:, H - 1:H, :].astype(jnp.float32)

    # ---- vertical pass: K ref-indexed sublane-offset reads, acc in registers ----
    acc = taps[0] * rows_ref[:, 0:H, :]
    for k in range(1, K):
        acc = acc + taps[k] * rows_ref[:, k:k + H, :]

    # ---- replicate padding (columns) for the horizontal pass ----
    cols_ref[:, :, pad:pad + W] = acc
    for c in range(pad):
        cols_ref[:, :, c:c + 1] = acc[:, :, 0:1]
        cols_ref[:, :, pad + W + c:pad + W + c + 1] = acc[:, :, W - 1:W]

    # ---- horizontal pass: K ref-indexed lane-offset reads ----
    acc = taps[0] * cols_ref[:, :, 0:W]
    for j in range(1, K):
        acc = acc + taps[j] * cols_ref[:, :, j:j + W]

    # conv(w, 1-x) == 2 - conv(w, x)  (taps sum to 2, replicate pad), so the
    # module output 1 - 2*clip(conv(w, 1-x), 0, 1) == clip(2*acc - 3, -1, 1).
    out_ref[...] = jnp.clip(2.0 * acc - 3.0, -1.0, 1.0).astype(out_ref.dtype)


def _block_footprint_bytes(pb, H, W, pad, itemsize=4):
    """Per-step VMEM footprint: double-buffered in/out blocks + the 2 scratches."""
    blk = pb * H * W
    scratch = pb * (H + 2 * pad) * W + pb * H * (W + 2 * pad)
    return itemsize * (2 * blk + 2 * blk + scratch)


def _pick_planes_per_step(P, H, W, pad, *, vmem_budget_bytes=8 << 20, min_grid=4):
    """Largest Pb dividing P whose footprint fits a v7x-safe VMEM budget while
    keeping the 'parallel' grid extent >= min_grid (v7x has 2 TensorCores;
    v5e/v6e have 128 MiB VMEM so the conservative budget also fits there)."""
    best = 1
    for pb in range(1, P + 1):
        if P % pb:
            continue
        if _block_footprint_bytes(pb, H, W, pad) > vmem_budget_bytes:
            break
        if pb == 1 or P // pb >= min_grid:
            best = pb
    return best


def my_dilate_blur(x: jnp.ndarray, kernel_size: int = 7, sigma: float = 0.8) -> jnp.ndarray:
    """x: (B, C, H, W) float32, NCHW.  Returns (B, C, H, W)."""
    B, C, H, W = x.shape
    K = kernel_size
    pad = (K - 1) // 2
    taps = _gaussian_taps_1d(K, sigma)

    P = B * C
    xp = x.reshape(P, H, W)                       # metadata-only; no HBM pass

    Pb = _pick_planes_per_step(P, H, W, pad)
    grid = (P // Pb,)

    # VMEM limit derived from the actual block footprint (re-derived per call,
    # so the same code stays within v7x's 64 MiB VMEM and can grow on v5e/v6e).
    footprint = _block_footprint_bytes(Pb, H, W, pad)
    vmem_limit = int(min(48 << 20, max(4 << 20, 2 * footprint)))

    kernel = functools.partial(_dilate_blur_kernel, taps=taps, H=H, W=W, K=K, pad=pad)

    out = pl.pallas_call(
        kernel,
        out_shape=jax.ShapeDtypeStruct((P, H, W), x.dtype),
        grid_spec=pltpu.PrefetchScalarGridSpec(
            num_scalar_prefetch=0,
            grid=grid,
            in_specs=[pl.BlockSpec((Pb, H, W), lambda g: (g, 0, 0))],
            out_specs=pl.BlockSpec((Pb, H, W), lambda g: (g, 0, 0)),
            scratch_shapes=[
                pltpu.VMEM((Pb, H + 2 * pad, W), jnp.float32),
                pltpu.VMEM((Pb, H, W + 2 * pad), jnp.float32),
            ],
        ),
        compiler_params=pltpu.CompilerParams(
            dimension_semantics=("parallel",),
            vmem_limit_bytes=vmem_limit,
        ),
    )(xp)
    return out.reshape(B, C, H, W)


def _reference(x: jnp.ndarray, kernel_size: int = 7, sigma: float = 0.8) -> jnp.ndarray:
    """Pure-JAX reference: faithful 49-tap depthwise conv of (1-x), as in PyTorch."""
    B, C, H, W = x.shape
    K = kernel_size
    pad = (K - 1) // 2
    coords = jnp.arange(K, dtype=jnp.float32)
    x_grid = jnp.tile(coords, (K,)).reshape(K, K)
    y_grid = x_grid.T
    mean = (K - 1) / 2.0
    var = sigma ** 2
    g = (1.0 / (2.0 * math.pi * var)) * jnp.exp(
        -((x_grid - mean) ** 2 + (y_grid - mean) ** 2) / (2.0 * var))
    g = 2.0 * g / jnp.sum(g)
    xpad = jnp.pad(1.0 - x, ((0, 0), (0, 0), (pad, pad), (pad, pad)), mode="edge")
    acc = jnp.zeros((B, C, H, W), jnp.float32)
    for ki in range(K):
        for kj in range(K):
            acc = acc + g[ki, kj] * xpad[:, :, ki:ki + H, kj:kj + W]
    return 1.0 - 2.0 * jnp.clip(acc, 0.0, 1.0)


if __name__ == "__main__":
    key = jax.random.PRNGKey(0)
    # Small image batch; W = 128 keeps the kernel's output stores lane-dense
    # (full 128-lane vst), the perf review's biggest single lever.  P = B*C = 8
    # gives Pb = 2 planes/step and an even 4-step "parallel" grid.
    B, C, H, W = 2, 4, 64, 128
    x = jax.random.uniform(key, (B, C, H, W), dtype=jnp.float32)

    out = my_dilate_blur(x)
    out = jax.block_until_ready(out)

    ref = _reference(x)
    assert out.shape == (B, C, H, W)
    assert jnp.allclose(out, ref, atol=1e-5, rtol=1e-5), float(jnp.max(jnp.abs(out - ref)))

    print("KERNEL_OK")
</pallas_src>

<mosaic_0001>
module attributes {stable_mosaic.version = 11 : i64} {
  func.func @_dilate_blur_kernel(%arg0: i32, %arg1: memref<2x64x128xf32, #tpu.memory_space<vmem>>, %arg2: memref<2x64x128xf32, #tpu.memory_space<vmem>>, %arg3: memref<2x70x128xf32, #tpu.memory_space<vmem>>, %arg4: memref<2x64x134xf32, #tpu.memory_space<vmem>>) attributes {dimension_semantics = [#tpu.dimension_semantics<parallel>], iteration_bounds = array<i64: 4>, scalar_prefetch = 0 : i64, scratch_operands = 2 : i64, tpu.core_type = #tpu.core_type<tc>, window_params = [{transform_indices = @transform_0, window_bounds = array<i64: 2, 64, 128>}, {transform_indices = @transform_1, window_bounds = array<i64: 2, 64, 128>}]} {
    %c0 = arith.constant 0 : index
    %c0_0 = arith.constant 0 : index
    %c0_1 = arith.constant 0 : index
    %0 = vector.load %arg1[%c0, %c0_0, %c0_1] : memref<2x64x128xf32, #tpu.memory_space<vmem>>, vector<2x64x128xf32>
    %c0_2 = arith.constant 0 : index
    %c3 = arith.constant 3 : index
    %c0_3 = arith.constant 0 : index
    %1 = vector.load %arg3[%c0_2, %c3, %c0_3] : memref<2x70x128xf32, #tpu.memory_space<vmem>>, vector<2x64x128xf32>
    tpu.vector_store %arg3[%c0_2, %c3, %c0_3], %0 {strides = array<i32>} : memref<2x70x128xf32, #tpu.memory_space<vmem>>, vector<2x64x128xf32>,
    %c0_4 = arith.constant 0 : index
    %c0_5 = arith.constant 0 : index
    %c0_6 = arith.constant 0 : index
    %2 = vector.load %arg1[%c0_4, %c0_5, %c0_6] : memref<2x64x128xf32, #tpu.memory_space<vmem>>, vector<2x1x128xf32>
    %c0_7 = arith.constant 0 : index
    %c0_8 = arith.constant 0 : index
    %c0_9 = arith.constant 0 : index
    %3 = vector.load %arg3[%c0_7, %c0_8, %c0_9] : memref<2x70x128xf32, #tpu.memory_space<vmem>>, vector<2x1x128xf32>
    tpu.vector_store %arg3[%c0_7, %c0_8, %c0_9], %2 {strides = array<i32>} : memref<2x70x128xf32, #tpu.memory_space<vmem>>, vector<2x1x128xf32>,
    %c0_10 = arith.constant 0 : index
    %c63 = arith.constant 63 : index
    %c0_11 = arith.constant 0 : index
    %4 = vector.load %arg1[%c0_10, %c63, %c0_11] : memref<2x64x128xf32, #tpu.memory_space<vmem>>, vector<2x1x128xf32>
    %c0_12 = arith.constant 0 : index
    %c67 = arith.constant 67 : index
    %c0_13 = arith.constant 0 : index
    %5 = vector.load %arg3[%c0_12, %c67, %c0_13] : memref<2x70x128xf32, #tpu.memory_space<vmem>>, vector<2x1x128xf32>
    tpu.vector_store %arg3[%c0_12, %c67, %c0_13], %4 {strides = array<i32>} : memref<2x70x128xf32, #tpu.memory_space<vmem>>, vector<2x1x128xf32>,
    %c0_14 = arith.constant 0 : index
    %c0_15 = arith.constant 0 : index
    %c0_16 = arith.constant 0 : index
    %6 = vector.load %arg1[%c0_14, %c0_15, %c0_16] : memref<2x64x128xf32, #tpu.memory_space<vmem>>, vector<2x1x128xf32>
    %c0_17 = arith.constant 0 : index
    %c1 = arith.constant 1 : index
    %c0_18 = arith.constant 0 : index
    %7 = vector.load %arg3[%c0_17, %c1, %c0_18] : memref<2x70x128xf32, #tpu.memory_space<vmem>>, vector<2x1x128xf32>
    tpu.vector_store %arg3[%c0_17, %c1, %c0_18], %6 {strides = array<i32>} : memref<2x70x128xf32, #tpu.memory_space<vmem>>, vector<2x1x128xf32>,
    %c0_19 = arith.constant 0 : index
    %c63_20 = arith.constant 63 : index
    %c0_21 = arith.constant 0 : index
    %8 = vector.load %arg1[%c0_19, %c63_20, %c0_21] : memref<2x64x128xf32, #tpu.memory_space<vmem>>, vector<2x1x128xf32>
    %c0_22 = arith.constant 0 : index
    %c68 = arith.constant 68 : index
    %c0_23 = arith.constant 0 : index
    %9 = vector.load %arg3[%c0_22, %c68, %c0_23] : memref<2x70x128xf32, #tpu.memory_space<vmem>>, vector<2x1x128xf32>
    tpu.vector_store %arg3[%c0_22, %c68, %c0_23], %8 {strides = array<i32>} : memref<2x70x128xf32, #tpu.memory_space<vmem>>, vector<2x1x128xf32>,
    %c0_24 = arith.constant 0 : index
    %c0_25 = arith.constant 0 : index
    %c0_26 = arith.constant 0 : index
    %10 = vector.load %arg1[%c0_24, %c0_25, %c0_26] : memref<2x64x128xf32, #tpu.memory_space<vmem>>, vector<2x1x128xf32>
    %c0_27 = arith.constant 0 : index
    %c2 = arith.constant 2 : index
    %c0_28 = arith.constant 0 : index
    %11 = vector.load %arg3[%c0_27, %c2, %c0_28] : memref<2x70x128xf32, #tpu.memory_space<vmem>>, vector<2x1x128xf32>
    tpu.vector_store %arg3[%c0_27, %c2, %c0_28], %10 {strides = array<i32>} : memref<2x70x128xf32, #tpu.memory_space<vmem>>, vector<2x1x128xf32>,
    %c0_29 = arith.constant 0 : index
    %c63_30 = arith.constant 63 : index
    %c0_31 = arith.constant 0 : index
    %12 = vector.load %arg1[%c0_29, %c63_30, %c0_31] : memref<2x64x128xf32, #tpu.memory_space<vmem>>, vector<2x1x128xf32>
    %c0_32 = arith.constant 0 : index
    %c69 = arith.constant 69 : index
    %c0_33 = arith.constant 0 : index
    %13 = vector.load %arg3[%c0_32, %c69, %c0_33] : memref<2x70x128xf32, #tpu.memory_space<vmem>>, vector<2x1x128xf32>
    tpu.vector_store %arg3[%c0_32, %c69, %c0_33], %12 {strides = array<i32>} : memref<2x70x128xf32, #tpu.memory_space<vmem>>, vector<2x1x128xf32>,
    %c0_34 = arith.constant 0 : index
    %c0_35 = arith.constant 0 : index
    %c0_36 = arith.constant 0 : index
    %14 = vector.load %arg3[%c0_34, %c0_35, %c0_36] : memref<2x70x128xf32, #tpu.memory_space<vmem>>, vector<2x64x128xf32>
    %cst = arith.constant 6.2330527E-4 : f32
    %15 = vector.broadcast %cst : f32 to vector<2x64x128xf32>
    %16 = arith.mulf %15, %14 : vector<2x64x128xf32>
    %c0_37 = arith.constant 0 : index
    %c1_38 = arith.constant 1 : index
    %c0_39 = arith.constant 0 : index
    %17 = vector.load %arg3[%c0_37, %c1_38, %c0_39] : memref<2x70x128xf32, #tpu.memory_space<vmem>>, vector<2x64x128xf32>
    %cst_40 = arith.constant 0.0309858639 : f32
    %18 = vector.broadcast %cst_40 : f32 to vector<2x64x128xf32>
    %19 = arith.mulf %18, %17 : vector<2x64x128xf32>
    %20 = arith.addf %16, %19 : vector<2x64x128xf32>
    %c0_41 = arith.constant 0 : index
    %c2_42 = arith.constant 2 : index
    %c0_43 = arith.constant 0 : index
    %21 = vector.load %arg3[%c0_41, %c2_42, %c0_43] : memref<2x70x128xf32, #tpu.memory_space<vmem>>, vector<2x64x128xf32>
    %cst_44 = arith.constant 0.322880119 : f32
    %22 = vector.broadcast %cst_44 : f32 to vector<2x64x128xf32>
    %23 = arith.mulf %22, %21 : vector<2x64x128xf32>
    %24 = arith.addf %20, %23 : vector<2x64x128xf32>
    %c0_45 = arith.constant 0 : index
    %c3_46 = arith.constant 3 : index
    %c0_47 = arith.constant 0 : index
    %25 = vector.load %arg3[%c0_45, %c3_46, %c0_47] : memref<2x70x128xf32, #tpu.memory_space<vmem>>, vector<2x64x128xf32>
    %cst_48 = arith.constant 7.052350e-01 : f32
    %26 = vector.broadcast %cst_48 : f32 to vector<2x64x128xf32>
    %27 = arith.mulf %26, %25 : vector<2x64x128xf32>
    %28 = arith.addf %24, %27 : vector<2x64x128xf32>
    %c0_49 = arith.constant 0 : index
    %c4 = arith.constant 4 : index
    %c0_50 = arith.constant 0 : index
    %29 = vector.load %arg3[%c0_49, %c4, %c0_50] : memref<2x70x128xf32, #tpu.memory_space<vmem>>, vector<2x64x128xf32>
    %cst_51 = arith.constant 0.322880119 : f32
    %30 = vector.broadcast %cst_51 : f32 to vector<2x64x128xf32>
    %31 = arith.mulf %30, %29 : vector<2x64x128xf32>
    %32 = arith.addf %28, %31 : vector<2x64x128xf32>
    %c0_52 = arith.constant 0 : index
    %c5 = arith.constant 5 : index
    %c0_53 = arith.constant 0 : index
    %33 = vector.load %arg3[%c0_52, %c5, %c0_53] : memref<2x70x128xf32, #tpu.memory_space<vmem>>, vector<2x64x128xf32>
    %cst_54 = arith.constant 0.0309858639 : f32
    %34 = vector.broadcast %cst_54 : f32 to vector<2x64x128xf32>
    %35 = arith.mulf %34, %33 : vector<2x64x128xf32>
    %36 = arith.addf %32, %35 : vector<2x64x128xf32>
    %c0_55 = arith.constant 0 : index
    %c6 = arith.constant 6 : index
    %c0_56 = arith.constant 0 : index
    %37 = vector.load %arg3[%c0_55, %c6, %c0_56] : memref<2x70x128xf32, #tpu.memory_space<vmem>>, vector<2x64x128xf32>
    %cst_57 = arith.constant 6.2330527E-4 : f32
    %38 = vector.broadcast %cst_57 : f32 to vector<2x64x128xf32>
    %39 = arith.mulf %38, %37 : vector<2x64x128xf32>
    %40 = arith.addf %36, %39 : vector<2x64x128xf32>
    %c0_58 = arith.constant 0 : index
    %c0_59 = arith.constant 0 : index
    %c3_60 = arith.constant 3 : index
    %41 = vector.load %arg4[%c0_58, %c0_59, %c3_60] : memref<2x64x134xf32, #tpu.memory_space<vmem>>, vector<2x64x128xf32>
    tpu.vector_store %arg4[%c0_58, %c0_59, %c3_60], %40 {strides = array<i32>} : memref<2x64x134xf32, #tpu.memory_space<vmem>>, vector<2x64x128xf32>,
    %42 = vector.extract_strided_slice %40 {offsets = [0, 0, 0], sizes = [2, 64, 1], strides = [1, 1, 1]} : vector<2x64x128xf32> to vector<2x64x1xf32>
    %c0_61 = arith.constant 0 : index
    %c0_62 = arith.constant 0 : index
    %c0_63 = arith.constant 0 : index
    %43 = vector.load %arg4[%c0_61, %c0_62, %c0_63] : memref<2x64x134xf32, #tpu.memory_space<vmem>>, vector<2x64x1xf32>
    tpu.vector_store %arg4[%c0_61, %c0_62, %c0_63], %42 {strides = array<i32>} : memref<2x64x134xf32, #tpu.memory_space<vmem>>, vector<2x64x1xf32>,
    %44 = vector.extract_strided_slice %40 {offsets = [0, 0, 127], sizes = [2, 64, 1], strides = [1, 1, 1]} : vector<2x64x128xf32> to vector<2x64x1xf32>
    %c0_64 = arith.constant 0 : index
    %c0_65 = arith.constant 0 : index
    %c131 = arith.constant 131 : index
    %45 = vector.load %arg4[%c0_64, %c0_65, %c131] : memref<2x64x134xf32, #tpu.memory_space<vmem>>, vector<2x64x1xf32>
    tpu.vector_store %arg4[%c0_64, %c0_65, %c131], %44 {strides = array<i32>} : memref<2x64x134xf32, #tpu.memory_space<vmem>>, vector<2x64x1xf32>,
    %46 = vector.extract_strided_slice %40 {offsets = [0, 0, 0], sizes = [2, 64, 1], strides = [1, 1, 1]} : vector<2x64x128xf32> to vector<2x64x1xf32>
    %c0_66 = arith.constant 0 : index
    %c0_67 = arith.constant 0 : index
    %c1_68 = arith.constant 1 : index
    %47 = vector.load %arg4[%c0_66, %c0_67, %c1_68] : memref<2x64x134xf32, #tpu.memory_space<vmem>>, vector<2x64x1xf32>
    tpu.vector_store %arg4[%c0_66, %c0_67, %c1_68], %46 {strides = array<i32>} : memref<2x64x134xf32, #tpu.memory_space<vmem>>, vector<2x64x1xf32>,
    %48 = vector.extract_strided_slice %40 {offsets = [0, 0, 127], sizes = [2, 64, 1], strides = [1, 1, 1]} : vector<2x64x128xf32> to vector<2x64x1xf32>
    %c0_69 = arith.constant 0 : index
    %c0_70 = arith.constant 0 : index
    %c132 = arith.constant 132 : index
    %49 = vector.load %arg4[%c0_69, %c0_70, %c132] : memref<2x64x134xf32, #tpu.memory_space<vmem>>, vector<2x64x1xf32>
    tpu.vector_store %arg4[%c0_69, %c0_70, %c132], %48 {strides = array<i32>} : memref<2x64x134xf32, #tpu.memory_space<vmem>>, vector<2x64x1xf32>,
    %50 = vector.extract_strided_slice %40 {offsets = [0, 0, 0], sizes = [2, 64, 1], strides = [1, 1, 1]} : vector<2x64x128xf32> to vector<2x64x1xf32>
    %c0_71 = arith.constant 0 : index
    %c0_72 = arith.constant 0 : index
    %c2_73 = arith.constant 2 : index
    %51 = vector.load %arg4[%c0_71, %c0_72, %c2_73] : memref<2x64x134xf32, #tpu.memory_space<vmem>>, vector<2x64x1xf32>
    tpu.vector_store %arg4[%c0_71, %c0_72, %c2_73], %50 {strides = array<i32>} : memref<2x64x134xf32, #tpu.memory_space<vmem>>, vector<2x64x1xf32>,
    %52 = vector.extract_strided_slice %40 {offsets = [0, 0, 127], sizes = [2, 64, 1], strides = [1, 1, 1]} : vector<2x64x128xf32> to vector<2x64x1xf32>
    %c0_74 = arith.constant 0 : index
    %c0_75 = arith.constant 0 : index
    %c133 = arith.constant 133 : index
    %53 = vector.load %arg4[%c0_74, %c0_75, %c133] : memref<2x64x134xf32, #tpu.memory_space<vmem>>, vector<2x64x1xf32>
    tpu.vector_store %arg4[%c0_74, %c0_75, %c133], %52 {strides = array<i32>} : memref<2x64x134xf32, #tpu.memory_space<vmem>>, vector<2x64x1xf32>,
    %c0_76 = arith.constant 0 : index
    %c0_77 = arith.constant 0 : index
    %c0_78 = arith.constant 0 : index
    %54 = vector.load %arg4[%c0_76, %c0_77, %c0_78] : memref<2x64x134xf32, #tpu.memory_space<vmem>>, vector<2x64x128xf32>
    %cst_79 = arith.constant 6.2330527E-4 : f32
    %55 = vector.broadcast %cst_79 : f32 to vector<2x64x128xf32>
    %56 = arith.mulf %55, %54 : vector<2x64x128xf32>
    %c0_80 = arith.constant 0 : index
    %c0_81 = arith.constant 0 : index
    %c1_82 = arith.constant 1 : index
    %57 = vector.load %arg4[%c0_80, %c0_81, %c1_82] : memref<2x64x134xf32, #tpu.memory_space<vmem>>, vector<2x64x128xf32>
    %cst_83 = arith.constant 0.0309858639 : f32
    %58 = vector.broadcast %cst_83 : f32 to vector<2x64x128xf32>
    %59 = arith.mulf %58, %57 : vector<2x64x128xf32>
    %60 = arith.addf %56, %59 : vector<2x64x128xf32>
    %c0_84 = arith.constant 0 : index
    %c0_85 = arith.constant 0 : index
    %c2_86 = arith.constant 2 : index
    %61 = vector.load %arg4[%c0_84, %c0_85, %c2_86] : memref<2x64x134xf32, #tpu.memory_space<vmem>>, vector<2x64x128xf32>
    %cst_87 = arith.constant 0.322880119 : f32
    %62 = vector.broadcast %cst_87 : f32 to vector<2x64x128xf32>
    %63 = arith.mulf %62, %61 : vector<2x64x128xf32>
    %64 = arith.addf %60, %63 : vector<2x64x128xf32>
    %c0_88 = arith.constant 0 : index
    %c0_89 = arith.constant 0 : index
    %c3_90 = arith.constant 3 : index
    %65 = vector.load %arg4[%c0_88, %c0_89, %c3_90] : memref<2x64x134xf32, #tpu.memory_space<vmem>>, vector<2x64x128xf32>
    %cst_91 = arith.constant 7.052350e-01 : f32
    %66 = vector.broadcast %cst_91 : f32 to vector<2x64x128xf32>
    %67 = arith.mulf %66, %65 : vector<2x64x128xf32>
    %68 = arith.addf %64, %67 : vector<2x64x128xf32>
    %c0_92 = arith.constant 0 : index
    %c0_93 = arith.constant 0 : index
    %c4_94 = arith.constant 4 : index
    %69 = vector.load %arg4[%c0_92, %c0_93, %c4_94] : memref<2x64x134xf32, #tpu.memory_space<vmem>>, vector<2x64x128xf32>
    %cst_95 = arith.constant 0.322880119 : f32
    %70 = vector.broadcast %cst_95 : f32 to vector<2x64x128xf32>
    %71 = arith.mulf %70, %69 : vector<2x64x128xf32>
    %72 = arith.addf %68, %71 : vector<2x64x128xf32>
    %c0_96 = arith.constant 0 : index
    %c0_97 = arith.constant 0 : index
    %c5_98 = arith.constant 5 : index
    %73 = vector.load %arg4[%c0_96, %c0_97, %c5_98] : memref<2x64x134xf32, #tpu.memory_space<vmem>>, vector<2x64x128xf32>
    %cst_99 = arith.constant 0.0309858639 : f32
    %74 = vector.broadcast %cst_99 : f32 to vector<2x64x128xf32>
    %75 = arith.mulf %74, %73 : vector<2x64x128xf32>
    %76 = arith.addf %72, %75 : vector<2x64x128xf32>
    %c0_100 = arith.constant 0 : index
    %c0_101 = arith.constant 0 : index
    %c6_102 = arith.constant 6 : index
    %77 = vector.load %arg4[%c0_100, %c0_101, %c6_102] : memref<2x64x134xf32, #tpu.memory_space<vmem>>, vector<2x64x128xf32>
    %cst_103 = arith.constant 6.2330527E-4 : f32
    %78 = vector.broadcast %cst_103 : f32 to vector<2x64x128xf32>
    %79 = arith.mulf %78, %77 : vector<2x64x128xf32>
    %80 = arith.addf %76, %79 : vector<2x64x128xf32>
    %cst_104 = arith.constant 2.000000e+00 : f32
    %81 = vector.broadcast %cst_104 : f32 to vector<2x64x128xf32>
    %82 = arith.mulf %81, %80 : vector<2x64x128xf32>
    %cst_105 = arith.constant 3.000000e+00 : f32
    %83 = vector.broadcast %cst_105 : f32 to vector<2x64x128xf32>
    %84 = arith.subf %82, %83 : vector<2x64x128xf32>
    %cst_106 = arith.constant -1.000000e+00 : f32
    %cst_107 = arith.constant 1.000000e+00 : f32
    %85 = vector.broadcast %cst_106 : f32 to vector<2x64x128xf32>
    %86 = arith.maximumf %85, %84 : vector<2x64x128xf32>
    %87 = vector.broadcast %cst_107 : f32 to vector<2x64x128xf32>
    %88 = arith.minimumf %87, %86 : vector<2x64x128xf32>
    %c0_108 = arith.constant 0 : index
    %c0_109 = arith.constant 0 : index
    %c0_110 = arith.constant 0 : index
    %89 = vector.load %arg2[%c0_108, %c0_109, %c0_110] : memref<2x64x128xf32, #tpu.memory_space<vmem>>, vector<2x64x128xf32>
    tpu.vector_store %arg2[%c0_108, %c0_109, %c0_110], %88 {strides = array<i32>} : memref<2x64x128xf32, #tpu.memory_space<vmem>>, vector<2x64x128xf32>,
    return
  }
  func.func @transform_0(%arg0: i32) -> (i32, i32, i32) {
    %c0_i32 = arith.constant 0 : i32
    %c0_i32_0 = arith.constant 0 : i32
    %c0_i32_1 = arith.constant 0 : i32
    return %arg0, %c0_i32, %c0_i32_0 : i32, i32, i32
  }
  func.func @transform_1(%arg0: i32) -> (i32, i32, i32) {
    %c0_i32 = arith.constant 0 : i32
    %c0_i32_0 = arith.constant 0 : i32
    %c0_i32_1 = arith.constant 0 : i32
    return %arg0, %c0_i32, %c0_i32_0 : i32, i32, i32
  }
}

</mosaic_0001>

<llo_original>
// kernel: tpu_custom_call.1
$region0: #{tpu_custom_call.1}
  #allocation0 [shape = 'u32[]', space=smem, size = 0x4, offset = 0x4, fixed_abs, tag = 'smem constant byte address 0x4 - core index']
  #allocation1 [shape = 'u32[144,128]{1,0:T(1,128)}', space=vmem, size = 0x12000, scoped, tag = 'internal scratch']
  #allocation2 [shape = 'f32[2,70,128]{2,1,0:T(8,128)}', space=vmem, size = 0x12000, scoped, tag = 'scratch operand']
  #allocation3 [shape = 'f32[2,64,134]{2,1,0:T(8,128)}', space=vmem, size = 0x20000, scoped, tag = 'scratch operand']
  %s0 = inlined_call_operand.hbm [shape: f32[8,64,128], index: 0, kind: input, shape index: {}]
  %s1 = inlined_call_operand.hbm [shape: f32[8,64,128], index: 1, kind: output, shape index: {}]
  %s2 = sld [smem:[#allocation0]]
  $region41: #{tpu_custom_call.1} parent=0
    _
  %s4 = ssub.s32 1, %s2
  %s5 = scalar_select 0, %s4, %s2
  $region1: #{tpu_custom_call.1} parent=0
    #allocation4 [shape = 'u8[131072]{0}', space=vmem, size = 0x20000, scoped, tag = 'input window, operand 0']
    #allocation5 [shape = 's32[2]{0}', space=sflag, size = 0x8, scoped, tag = 'scoped memory for tpu_custom_call.1']
    #allocation6 [shape = 's32[2]{0}', space=sflag, size = 0x8, scoped, tag = 'scoped memory for tpu_custom_call.1']
    #allocation7 [shape = 'u8[131072]{0}', space=vmem, size = 0x20000, scoped, tag = 'output window, operand 0']
    %6 = vsyncpa [#allocation5], 0
    %s7 = scalar_lea.sflag [#allocation5], 1
    %8 = vsyncpa %s7, 0
    %9 = vsyncpa [#allocation6], 0
    %s10 = scalar_lea.sflag [#allocation6], 1
    %11 = vsyncpa %s10, 0
    loop: start=0, step=1, limit=6
    $region2: #{tpu_custom_call.1} parent=1 // loop_pre_header
      _
    $region3: #{tpu_custom_call.1} parent=1 // loop_header
      %s13 = sphi 0, %s17
      %p14 = scmp.ge.s32.totalorder %s13, 6
      %s23 = sphi 0, %s25
      %s26 = sphi 0, %s23
      %s27 = sphi 0, %s26
      %s43 = sphi 0, %s27
      %s49 = sphi 0, %s51
      %s52 = sphi 0, %s49
      %s53 = sphi 0, %s52
      %s69 = sphi 0, %s53
    $region4: #{tpu_custom_call.1} parent=1 // loop_header_branch
      %16 = sbr.rel (%p14) target = $region8
    $region5: #{tpu_custom_call.1} parent=1 // loop_body
      %s18 = ssub.s32 %s13, 1
      %s19 = ssub.s32 %s13, 2
      %s20 = sadd.s32 %s13, 1
      %s21 = ssub.s32 %s13, %s20
      %p22 = scmp.eq.s32.totalorder %s21, 0
      %s24 = sadd.s32 %s23, 1
      %s25 = scalar_select %p22, %s23, %s24
      %p28 = pneg %p22
      %p29 = scmp.eq.s32.totalorder %s13, 3
      %p30 = por %p28, %p29
      %p31 = scmp.ne.s32.totalorder %s23, %s26
      %p32 = scmp.eq.s32.totalorder %s13, 0
      %p33 = por %p31, %p32
      %p34 = scmp.ne.s32.totalorder %s23, %s26
      %p35 = scmp.eq.s32.totalorder %s18, 3
      %p36 = por %p34, %p35
      %p37 = scmp.ne.s32.totalorder %s26, %s27
      %p38 = scmp.eq.s32.totalorder %s18, 0
      %p39 = por %p37, %p38
      %p40 = scmp.ne.s32.totalorder %s26, %s27
      %p41 = scmp.eq.s32.totalorder %s19, 3
      %p42 = por %p40, %p41
      %p44 = scmp.ne.s32.totalorder %s27, %s43
      %p45 = scmp.eq.s32.totalorder %s19, 0
      %p46 = por %p44, %p45
      %s47 = ssub.s32 %s13, %s20
      %p48 = scmp.eq.s32.totalorder %s47, 0
      %s50 = sadd.s32 %s49, 1
      %s51 = scalar_select %p48, %s49, %s50
      %p54 = pneg %p48
      %p55 = scmp.eq.s32.totalorder %s13, 3
      %p56 = por %p54, %p55
      %p57 = scmp.ne.s32.totalorder %s49, %s52
      %p58 = scmp.eq.s32.totalorder %s13, 0
      %p59 = por %p57, %p58
      %p60 = scmp.ne.s32.totalorder %s49, %s52
      %p61 = scmp.eq.s32.totalorder %s18, 3
      %p62 = por %p60, %p61
      %p63 = scmp.ne.s32.totalorder %s52, %s53
      %p64 = scmp.eq.s32.totalorder %s18, 0
      %p65 = por %p63, %p64
      %p66 = scmp.ne.s32.totalorder %s52, %s53
      %p67 = scmp.eq.s32.totalorder %s19, 3
      %p68 = por %p66, %p67
      %p70 = scmp.ne.s32.totalorder %s53, %s69
      %p71 = scmp.eq.s32.totalorder %s19, 0
      %p72 = por %p70, %p71
      %p73 = scmp.le.s32.totalorder 1, %s13
      %p74 = scmp.lt.s32.totalorder %s13, 5
      %p75 = pnand %p73, %p74
      %p76 = pneg %p75
      // Predicated region
      $region9: #{tpu_custom_call.1} parent=5 // pred_check
        _
      $region10: #{tpu_custom_call.1} parent=5 // pred_check_branch
        %78 = sbr.rel (%p75) target = $region12
      $region11: #{tpu_custom_call.1} parent=5 // pred_region
        %s79 = ssub.s32 %s13, 1
      $region12: #{tpu_custom_call.1} parent=5 // pred_fallthru
        _
      %p80 = scmp.lt.s32.totalorder %s13, 4
      // Predicated region
      $region13: #{tpu_custom_call.1} parent=5 // pred_check
        %p81 = pneg %p80
      $region14: #{tpu_custom_call.1} parent=5 // pred_check_branch
        %83 = sbr.rel (%p81) target = $region16
      $region15: #{tpu_custom_call.1} parent=5 // pred_region
        // Predicated region
        $region17: #{tpu_custom_call.1} parent=15 // pred_check
          %p84 = pneg %p33
        $region18: #{tpu_custom_call.1} parent=15 // pred_check_branch
          %86 = sbr.rel (%p84) target = $region20
        $region19: #{tpu_custom_call.1} parent=15 // pred_region
          %s87 = sand.u32 %s23, 1
          %s88 = scalar_lea.sflag [#allocation5], %s87
          %s89 = sand.u32 %s23, 1
          %s90 = smul.addr %s89, 128
          %s91 = scalar_lea.vmem [#allocation4], %s90
          %s92 = smul.u32 2, %s13
          %s94 = ssub.s32 2048, 2048
          %95 = vsyncadd %s88, %s94
          %s96 = smul.addr %s92, 8
          %s97 = smul.addr %s96, 128
          %s98 = scalar_lea.hbm %s0, %s97
          %s99 = sshll.u32 %s91, 4
          %s100 = int_to_ptr.vmem [resolvable:$true] %s99
          %105 = dma.hbm_to_vmem [thread:$0]  %s98, 2048, %s100, %s88, 128, 128, 8
        $region20: #{tpu_custom_call.1} parent=15 // pred_fallthru
          _
      $region16: #{tpu_custom_call.1} parent=5 // pred_fallthru
        _
      %p106 = scmp.le.s32.totalorder 1, %s13
      %p107 = scmp.lt.s32.totalorder %s13, 5
      %p108 = pnand %p106, %p107
      %p109 = pneg %p108
      // Predicated region
      $region21: #{tpu_custom_call.1} parent=5 // pred_check
        _
      $region22: #{tpu_custom_call.1} parent=5 // pred_check_branch
        %111 = sbr.rel (%p108) target = $region24
      $region23: #{tpu_custom_call.1} parent=5 // pred_region
        %s112 = ssub.s32 %s13, 1
        %s113 = sand.u32 %s26, 1
        %s114 = scalar_lea.sflag [#allocation5], %s113
        %s115 = sand.u32 %s26, 1
        %s116 = smul.addr %s115, 128
        %s117 = scalar_lea.vmem [#allocation4], %s116
        // Predicated region
        $region25: #{tpu_custom_call.1} parent=23 // pred_check
          %p118 = pneg %p39
        $region26: #{tpu_custom_call.1} parent=23 // pred_check_branch
          %120 = sbr.rel (%p118) target = $region28
        $region27: #{tpu_custom_call.1} parent=23 // pred_region
          %121 = dma.done %s114, 2048
        $region28: #{tpu_custom_call.1} parent=23 // pred_fallthru
          _
        %s122 = sand.u32 %s26, 1
        %s123 = scalar_lea.sflag [#allocation5], %s122
        %s124 = sand.u32 %s26, 1
        %s125 = smul.addr %s124, 128
        %s126 = scalar_lea.vmem [#allocation4], %s125
        %p127 = pneg %p39
        %p128 = pneg %p36
        %p129 = pneg %p65
        %p130 = pneg %p62
        %s131 = sand.u32 %s52, 1
        %s132 = scalar_lea.sflag [#allocation6], %s131
        %s133 = sand.u32 %s52, 1
        %s134 = smul.addr %s133, 128
        %s135 = scalar_lea.vmem [#allocation7], %s134
        %s136 = smul.u32 2, %s18
        %s137 = smul.u32 2, %s18
        %v138 = vld [vmem:[%s117] sm:$0xff]
        %v139 = vld [vmem:[%s117 + $0x8] sm:$0xff]
        %v140 = vld [vmem:[%s117 + $0x10] sm:$0xff]
        %v141 = vld [vmem:[%s117 + $0x18] sm:$0xff]
        %v142 = vld [vmem:[%s117 + $0x20] sm:$0xff]
        %v143 = vld [vmem:[%s117 + $0x28] sm:$0xff]
        %v144 = vld [vmem:[%s117 + $0x30] sm:$0xff]
        %v145 = vld [vmem:[%s117 + $0x38] sm:$0xff]
        %v146 = vld [vmem:[%s117 + $0x40] sm:$0xff]
        %v147 = vld [vmem:[%s117 + $0x48] sm:$0xff]
        %v148 = vld [vmem:[%s117 + $0x50] sm:$0xff]
        %v149 = vld [vmem:[%s117 + $0x58] sm:$0xff]
        %v150 = vld [vmem:[%s117 + $0x60] sm:$0xff]
        %v151 = vld [vmem:[%s117 + $0x68] sm:$0xff]
        %v152 = vld [vmem:[%s117 + $0x70] sm:$0xff]
        %v153 = vld [vmem:[%s117 + $0x78] sm:$0xff]
        %154 = vst [vmem:[#allocation2 + $0x3] sm:$0xff] %v138
        %155 = vst [vmem:[#allocation2 + $0xb] sm:$0xff] %v139
        %156 = vst [vmem:[#allocation2 + $0x13] sm:$0xff] %v140
        %157 = vst [vmem:[#allocation2 + $0x1b] sm:$0xff] %v141
        %158 = vst [vmem:[#allocation2 + $0x23] sm:$0xff] %v142
        %159 = vst [vmem:[#allocation2 + $0x2b] sm:$0xff] %v143
        %160 = vst [vmem:[#allocation2 + $0x33] sm:$0xff] %v144
        %161 = vst [vmem:[#allocation2 + $0x3b] sm:$0xff] %v145
        %162 = vst [vmem:[#allocation2 + $0x4b] sm:$0xff] %v146
        %163 = vst [vmem:[#allocation2 + $0x53] sm:$0xff] %v147
        %164 = vst [vmem:[#allocation2 + $0x5b] sm:$0xff] %v148
        %165 = vst [vmem:[#allocation2 + $0x63] sm:$0xff] %v149
        %166 = vst [vmem:[#allocation2 + $0x6b] sm:$0xff] %v150
        %167 = vst [vmem:[#allocation2 + $0x73] sm:$0xff] %v151
        %168 = vst [vmem:[#allocation2 + $0x7b] sm:$0xff] %v152
        %169 = vst [vmem:[#allocation2 + $0x83] sm:$0xff] %v153
        %v170 = vld [vmem:[%s117] sm:$0x1]
        %v171 = vld [vmem:[%s117 + $0x40] sm:$0x1]
        %172 = vst [vmem:[#allocation2] sm:$0x1] %v170
        %173 = vst [vmem:[#allocation2 + $0x48] sm:$0x1] %v171
        %v174 = vld [vmem:[%s117 + $0x3f] sm:$0x1]
        %v175 = vld [vmem:[%s117 + $0x7f] sm:$0x1]
        %176 = vst [vmem:[#allocation2 + $0x43] sm:$0x1] %v174
        %177 = vst [vmem:[#allocation2 + $0x8b] sm:$0x1] %v175
        %v178 = vld [vmem:[%s117] sm:$0x1]
        %v179 = vld [vmem:[%s117 + $0x40] sm:$0x1]
        %180 = vst [vmem:[#allocation2 + $0x1] sm:$0x1] %v178
        %181 = vst [vmem:[#allocation2 + $0x49] sm:$0x1] %v179
        %v182 = vld [vmem:[%s117 + $0x3f] sm:$0x1]
        %v183 = vld [vmem:[%s117 + $0x7f] sm:$0x1]
        %184 = vst [vmem:[#allocation2 + $0x44] sm:$0x1] %v182
        %185 = vst [vmem:[#allocation2 + $0x8c] sm:$0x1] %v183
        %v186 = vld [vmem:[%s117] sm:$0x1]
        %v187 = vld [vmem:[%s117 + $0x40] sm:$0x1]
        %188 = vst [vmem:[#allocation2 + $0x2] sm:$0x1] %v186
        %189 = vst [vmem:[#allocation2 + $0x4a] sm:$0x1] %v187
        %v190 = vld [vmem:[%s117 + $0x3f] sm:$0x1]
        %v191 = vld [vmem:[%s117 + $0x7f] sm:$0x1]
        %192 = vst [vmem:[#allocation2 + $0x45] sm:$0x1] %v190
        %193 = vst [vmem:[#allocation2 + $0x8d] sm:$0x1] %v191
        %v194 = vld [vmem:[#allocation2] sm:$0xff]
        %v195 = vld [vmem:[#allocation2 + $0x8] sm:$0xff]
        %v196 = vld [vmem:[#allocation2 + $0x10] sm:$0xff]
        %v197 = vld [vmem:[#allocation2 + $0x18] sm:$0xff]
        %v198 = vld [vmem:[#allocation2 + $0x20] sm:$0xff]
        %v199 = vld [vmem:[#allocation2 + $0x28] sm:$0xff]
        %v200 = vld [vmem:[#allocation2 + $0x30] sm:$0xff]
        %v201 = vld [vmem:[#allocation2 + $0x38] sm:$0xff]
        %v202 = vld [vmem:[#allocation2 + $0x48] sm:$0xff]
        %v203 = vld [vmem:[#allocation2 + $0x50] sm:$0xff]
        %v204 = vld [vmem:[#allocation2 + $0x58] sm:$0xff]
        %v205 = vld [vmem:[#allocation2 + $0x60] sm:$0xff]
        %v206 = vld [vmem:[#allocation2 + $0x68] sm:$0xff]
        %v207 = vld [vmem:[#allocation2 + $0x70] sm:$0xff]
        %v208 = vld [vmem:[#allocation2 + $0x78] sm:$0xff]
        %v209 = vld [vmem:[#allocation2 + $0x80] sm:$0xff]
        %v210 = vmul.f32 %v194, 0.00062330527
        %v211 = vmul.f32 %v195, 0.00062330527
        %v212 = vmul.f32 %v196, 0.00062330527
        %v213 = vmul.f32 %v197, 0.00062330527
        %v214 = vmul.f32 %v198, 0.00062330527
        %v215 = vmul.f32 %v199, 0.00062330527
        %v216 = vmul.f32 %v200, 0.00062330527
        %v217 = vmul.f32 %v201, 0.00062330527
        %v218 = vmul.f32 %v202, 0.00062330527
        %v219 = vmul.f32 %v203, 0.00062330527
        %v220 = vmul.f32 %v204, 0.00062330527
        %v221 = vmul.f32 %v205, 0.00062330527
        %v222 = vmul.f32 %v206, 0.00062330527
        %v223 = vmul.f32 %v207, 0.00062330527
        %v224 = vmul.f32 %v208, 0.00062330527
        %v225 = vmul.f32 %v209, 0.00062330527
        %v226 = vld [vmem:[#allocation2 + $0x1] sm:$0xff]
        %v227 = vld [vmem:[#allocation2 + $0x9] sm:$0xff]
        %v228 = vld [vmem:[#allocation2 + $0x11] sm:$0xff]
        %v229 = vld [vmem:[#allocation2 + $0x19] sm:$0xff]
        %v230 = vld [vmem:[#allocation2 + $0x21] sm:$0xff]
        %v231 = vld [vmem:[#allocation2 + $0x29] sm:$0xff]
        %v232 = vld [vmem:[#allocation2 + $0x31] sm:$0xff]
        %v233 = vld [vmem:[#allocation2 + $0x39] sm:$0xff]
        %v234 = vld [vmem:[#allocation2 + $0x49] sm:$0xff]
        %v235 = vld [vmem:[#allocation2 + $0x51] sm:$0xff]
        %v236 = vld [vmem:[#allocation2 + $0x59] sm:$0xff]
        %v237 = vld [vmem:[#allocation2 + $0x61] sm:$0xff]
        %v238 = vld [vmem:[#allocation2 + $0x69] sm:$0xff]
        %v239 = vld [vmem:[#allocation2 + $0x71] sm:$0xff]
        %v240 = vld [vmem:[#allocation2 + $0x79] sm:$0xff]
        %v241 = vld [vmem:[#allocation2 + $0x81] sm:$0xff]
        %v242 = vmul.f32 %v226, 0.030985864
        %v243 = vmul.f32 %v227, 0.030985864
        %v244 = vmul.f32 %v228, 0.030985864
        %v245 = vmul.f32 %v229, 0.030985864
        %v246 = vmul.f32 %v230, 0.030985864
        %v247 = vmul.f32 %v231, 0.030985864
        %v248 = vmul.f32 %v232, 0.030985864
        %v249 = vmul.f32 %v233, 0.030985864
        %v250 = vmul.f32 %v234, 0.030985864
        %v251 = vmul.f32 %v235, 0.030985864
        %v252 = vmul.f32 %v236, 0.030985864
        %v253 = vmul.f32 %v237, 0.030985864
        %v254 = vmul.f32 %v238, 0.030985864
        %v255 = vmul.f32 %v239, 0.030985864
        %v256 = vmul.f32 %v240, 0.030985864
        %v257 = vmul.f32 %v241, 0.030985864
        %v258 = vadd.f32 %v210, %v242
        %v259 = vadd.f32 %v211, %v243
        %v260 = vadd.f32 %v212, %v244
        %v261 = vadd.f32 %v213, %v245
        %v262 = vadd.f32 %v214, %v246
        %v263 = vadd.f32 %v215, %v247
        %v264 = vadd.f32 %v216, %v248
        %v265 = vadd.f32 %v217, %v249
        %v266 = vadd.f32 %v218, %v250
        %v267 = vadd.f32 %v219, %v251
        %v268 = vadd.f32 %v220, %v252
        %v269 = vadd.f32 %v221, %v253
        %v270 = vadd.f32 %v222, %v254
        %v271 = vadd.f32 %v223, %v255
        %v272 = vadd.f32 %v224, %v256
        %v273 = vadd.f32 %v225, %v257
        %v274 = vld [vmem:[#allocation2 + $0x2] sm:$0xff]
        %v275 = vld [vmem:[#allocation2 + $0xa] sm:$0xff]
        %v276 = vld [vmem:[#allocation2 + $0x12] sm:$0xff]
        %v277 = vld [vmem:[#allocation2 + $0x1a] sm:$0xff]
        %v278 = vld [vmem:[#allocation2 + $0x22] sm:$0xff]
        %v279 = vld [vmem:[#allocation2 + $0x2a] sm:$0xff]
        %v280 = vld [vmem:[#allocation2 + $0x32] sm:$0xff]
        %v281 = vld [vmem:[#allocation2 + $0x3a] sm:$0xff]
        %v282 = vld [vmem:[#allocation2 + $0x4a] sm:$0xff]
        %v283 = vld [vmem:[#allocation2 + $0x52] sm:$0xff]
        %v284 = vld [vmem:[#allocation2 + $0x5a] sm:$0xff]
        %v285 = vld [vmem:[#allocation2 + $0x62] sm:$0xff]
        %v286 = vld [vmem:[#allocation2 + $0x6a] sm:$0xff]
        %v287 = vld [vmem:[#allocation2 + $0x72] sm:$0xff]
        %v288 = vld [vmem:[#allocation2 + $0x7a] sm:$0xff]
        %v289 = vld [vmem:[#allocation2 + $0x82] sm:$0xff]
        %v290 = vmul.f32 %v274, 0.32288012
        %v291 = vmul.f32 %v275, 0.32288012
        %v292 = vmul.f32 %v276, 0.32288012
        %v293 = vmul.f32 %v277, 0.32288012
        %v294 = vmul.f32 %v278, 0.32288012
        %v295 = vmul.f32 %v279, 0.32288012
        %v296 = vmul.f32 %v280, 0.32288012
        %v297 = vmul.f32 %v281, 0.32288012
        %v298 = vmul.f32 %v282, 0.32288012
        %v299 = vmul.f32 %v283, 0.32288012
        %v300 = vmul.f32 %v284, 0.32288012
        %v301 = vmul.f32 %v285, 0.32288012
        %v302 = vmul.f32 %v286, 0.32288012
        %v303 = vmul.f32 %v287, 0.32288012
        %v304 = vmul.f32 %v288, 0.32288012
        %v305 = vmul.f32 %v289, 0.32288012
        %v306 = vadd.f32 %v258, %v290
        %v307 = vadd.f32 %v259, %v291
        %v308 = vadd.f32 %v260, %v292
        %v309 = vadd.f32 %v261, %v293
        %v310 = vadd.f32 %v262, %v294
        %v311 = vadd.f32 %v263, %v295
        %v312 = vadd.f32 %v264, %v296
        %v313 = vadd.f32 %v265, %v297
        %v314 = vadd.f32 %v266, %v298
        %v315 = vadd.f32 %v267, %v299
        %v316 = vadd.f32 %v268, %v300
        %v317 = vadd.f32 %v269, %v301
        %v318 = vadd.f32 %v270, %v302
        %v319 = vadd.f32 %v271, %v303
        %v320 = vadd.f32 %v272, %v304
        %v321 = vadd.f32 %v273, %v305
        %v322 = vld [vmem:[#allocation2 + $0x3] sm:$0xff]
        %v323 = vld [vmem:[#allocation2 + $0xb] sm:$0xff]
        %v324 = vld [vmem:[#allocation2 + $0x13] sm:$0xff]
        %v325 = vld [vmem:[#allocation2 + $0x1b] sm:$0xff]
        %v326 = vld [vmem:[#allocation2 + $0x23] sm:$0xff]
        %v327 = vld [vmem:[#allocation2 + $0x2b] sm:$0xff]
        %v328 = vld [vmem:[#allocation2 + $0x33] sm:$0xff]
        %v329 = vld [vmem:[#allocation2 + $0x3b] sm:$0xff]
        %v330 = vld [vmem:[#allocation2 + $0x4b] sm:$0xff]
        %v331 = vld [vmem:[#allocation2 + $0x53] sm:$0xff]
        %v332 = vld [vmem:[#allocation2 + $0x5b] sm:$0xff]
        %v333 = vld [vmem:[#allocation2 + $0x63] sm:$0xff]
        %v334 = vld [vmem:[#allocation2 + $0x6b] sm:$0xff]
        %v335 = vld [vmem:[#allocation2 + $0x73] sm:$0xff]
        %v336 = vld [vmem:[#allocation2 + $0x7b] sm:$0xff]
        %v337 = vld [vmem:[#allocation2 + $0x83] sm:$0xff]
        %v338 = vmul.f32 %v322, 0.705235
        %v339 = vmul.f32 %v323, 0.705235
        %v340 = vmul.f32 %v324, 0.705235
        %v341 = vmul.f32 %v325, 0.705235
        %v342 = vmul.f32 %v326, 0.705235
        %v343 = vmul.f32 %v327, 0.705235
        %v344 = vmul.f32 %v328, 0.705235
        %v345 = vmul.f32 %v329, 0.705235
        %v346 = vmul.f32 %v330, 0.705235
        %v347 = vmul.f32 %v331, 0.705235
        %v348 = vmul.f32 %v332, 0.705235
        %v349 = vmul.f32 %v333, 0.705235
        %v350 = vmul.f32 %v334, 0.705235
        %v351 = vmul.f32 %v335, 0.705235
        %v352 = vmul.f32 %v336, 0.705235
        %v353 = vmul.f32 %v337, 0.705235
        %v354 = vadd.f32 %v306, %v338
        %v355 = vadd.f32 %v307, %v339
        %v356 = vadd.f32 %v308, %v340
        %v357 = vadd.f32 %v309, %v341
        %v358 = vadd.f32 %v310, %v342
        %v359 = vadd.f32 %v311, %v343
        %v360 = vadd.f32 %v312, %v344
        %v361 = vadd.f32 %v313, %v345
        %v362 = vadd.f32 %v314, %v346
        %v363 = vadd.f32 %v315, %v347
        %v364 = vadd.f32 %v316, %v348
        %v365 = vadd.f32 %v317, %v349
        %v366 = vadd.f32 %v318, %v350
        %v367 = vadd.f32 %v319, %v351
        %v368 = vadd.f32 %v320, %v352
        %v369 = vadd.f32 %v321, %v353
        %v370 = vld [vmem:[#allocation2 + $0x4] sm:$0xff]
        %v371 = vld [vmem:[#allocation2 + $0xc] sm:$0xff]
        %v372 = vld [vmem:[#allocation2 + $0x14] sm:$0xff]
        %v373 = vld [vmem:[#allocation2 + $0x1c] sm:$0xff]
        %v374 = vld [vmem:[#allocation2 + $0x24] sm:$0xff]
        %v375 = vld [vmem:[#allocation2 + $0x2c] sm:$0xff]
        %v376 = vld [vmem:[#allocation2 + $0x34] sm:$0xff]
        %v377 = vld [vmem:[#allocation2 + $0x3c] sm:$0xff]
        %v378 = vld [vmem:[#allocation2 + $0x4c] sm:$0xff]
        %v379 = vld [vmem:[#allocation2 + $0x54] sm:$0xff]
        %v380 = vld [vmem:[#allocation2 + $0x5c] sm:$0xff]
        %v381 = vld [vmem:[#allocation2 + $0x64] sm:$0xff]
        %v382 = vld [vmem:[#allocation2 + $0x6c] sm:$0xff]
        %v383 = vld [vmem:[#allocation2 + $0x74] sm:$0xff]
        %v384 = vld [vmem:[#allocation2 + $0x7c] sm:$0xff]
        %v385 = vld [vmem:[#allocation2 + $0x84] sm:$0xff]
        %v386 = vmul.f32 %v370, 0.32288012
        %v387 = vmul.f32 %v371, 0.32288012
        %v388 = vmul.f32 %v372, 0.32288012
        %v389 = vmul.f32 %v373, 0.32288012
        %v390 = vmul.f32 %v374, 0.32288012
        %v391 = vmul.f32 %v375, 0.32288012
        %v392 = vmul.f32 %v376, 0.32288012
        %v393 = vmul.f32 %v377, 0.32288012
        %v394 = vmul.f32 %v378, 0.32288012
        %v395 = vmul.f32 %v379, 0.32288012
        %v396 = vmul.f32 %v380, 0.32288012
        %v397 = vmul.f32 %v381, 0.32288012
        %v398 = vmul.f32 %v382, 0.32288012
        %v399 = vmul.f32 %v383, 0.32288012
        %v400 = vmul.f32 %v384, 0.32288012
        %v401 = vmul.f32 %v385, 0.32288012
        %v402 = vadd.f32 %v354, %v386
        %v403 = vadd.f32 %v355, %v387
        %v404 = vadd.f32 %v356, %v388
        %v405 = vadd.f32 %v357, %v389
        %v406 = vadd.f32 %v358, %v390
        %v407 = vadd.f32 %v359, %v391
        %v408 = vadd.f32 %v360, %v392
        %v409 = vadd.f32 %v361, %v393
        %v410 = vadd.f32 %v362, %v394
        %v411 = vadd.f32 %v363, %v395
        %v412 = vadd.f32 %v364, %v396
        %v413 = vadd.f32 %v365, %v397
        %v414 = vadd.f32 %v366, %v398
        %v415 = vadd.f32 %v367, %v399
        %v416 = vadd.f32 %v368, %v400
        %v417 = vadd.f32 %v369, %v401
        %v418 = vld [vmem:[#allocation2 + $0x5] sm:$0xff]
        %v419 = vld [vmem:[#allocation2 + $0xd] sm:$0xff]
        %v420 = vld [vmem:[#allocation2 + $0x15] sm:$0xff]
        %v421 = vld [vmem:[#allocation2 + $0x1d] sm:$0xff]
        %v422 = vld [vmem:[#allocation2 + $0x25] sm:$0xff]
        %v423 = vld [vmem:[#allocation2 + $0x2d] sm:$0xff]
        %v424 = vld [vmem:[#allocation2 + $0x35] sm:$0xff]
        %v425 = vld [vmem:[#allocation2 + $0x3d] sm:$0xff]
        %v426 = vld [vmem:[#allocation2 + $0x4d] sm:$0xff]
        %v427 = vld [vmem:[#allocation2 + $0x55] sm:$0xff]
        %v428 = vld [vmem:[#allocation2 + $0x5d] sm:$0xff]
        %v429 = vld [vmem:[#allocation2 + $0x65] sm:$0xff]
        %v430 = vld [vmem:[#allocation2 + $0x6d] sm:$0xff]
        %v431 = vld [vmem:[#allocation2 + $0x75] sm:$0xff]
        %v432 = vld [vmem:[#allocation2 + $0x7d] sm:$0xff]
        %v433 = vld [vmem:[#allocation2 + $0x85] sm:$0xff]
        %v434 = vmul.f32 %v418, 0.030985864
        %v435 = vmul.f32 %v419, 0.030985864
        %v436 = vmul.f32 %v420, 0.030985864
        %v437 = vmul.f32 %v421, 0.030985864
        %v438 = vmul.f32 %v422, 0.030985864
        %v439 = vmul.f32 %v423, 0.030985864
        %v440 = vmul.f32 %v424, 0.030985864
        %v441 = vmul.f32 %v425, 0.030985864
        %v442 = vmul.f32 %v426, 0.030985864
        %v443 = vmul.f32 %v427, 0.030985864
        %v444 = vmul.f32 %v428, 0.030985864
        %v445 = vmul.f32 %v429, 0.030985864
        %v446 = vmul.f32 %v430, 0.030985864
        %v447 = vmul.f32 %v431, 0.030985864
        %v448 = vmul.f32 %v432, 0.030985864
        %v449 = vmul.f32 %v433, 0.030985864
        %v450 = vadd.f32 %v402, %v434
        %v451 = vadd.f32 %v403, %v435
        %v452 = vadd.f32 %v404, %v436
        %v453 = vadd.f32 %v405, %v437
        %v454 = vadd.f32 %v406, %v438
        %v455 = vadd.f32 %v407, %v439
        %v456 = vadd.f32 %v408, %v440
        %v457 = vadd.f32 %v409, %v441
        %v458 = vadd.f32 %v410, %v442
        %v459 = vadd.f32 %v411, %v443
        %v460 = vadd.f32 %v412, %v444
        %v461 = vadd.f32 %v413, %v445
        %v462 = vadd.f32 %v414, %v446
        %v463 = vadd.f32 %v415, %v447
        %v464 = vadd.f32 %v416, %v448
        %v465 = vadd.f32 %v417, %v449
        %v466 = vld [vmem:[#allocation2 + $0x6] sm:$0xff]
        %v467 = vld [vmem:[#allocation2 + $0xe] sm:$0xff]
        %v468 = vld [vmem:[#allocation2 + $0x16] sm:$0xff]
        %v469 = vld [vmem:[#allocation2 + $0x1e] sm:$0xff]
        %v470 = vld [vmem:[#allocation2 + $0x26] sm:$0xff]
        %v471 = vld [vmem:[#allocation2 + $0x2e] sm:$0xff]
        %v472 = vld [vmem:[#allocation2 + $0x36] sm:$0xff]
        %v473 = vld [vmem:[#allocation2 + $0x3e] sm:$0xff]
        %v474 = vld [vmem:[#allocation2 + $0x4e] sm:$0xff]
        %v475 = vld [vmem:[#allocation2 + $0x56] sm:$0xff]
        %v476 = vld [vmem:[#allocation2 + $0x5e] sm:$0xff]
        %v477 = vld [vmem:[#allocation2 + $0x66] sm:$0xff]
        %v478 = vld [vmem:[#allocation2 + $0x6e] sm:$0xff]
        %v479 = vld [vmem:[#allocation2 + $0x76] sm:$0xff]
        %v480 = vld [vmem:[#allocation2 + $0x7e] sm:$0xff]
        %v481 = vld [vmem:[#allocation2 + $0x86] sm:$0xff]
        %v482 = vmul.f32 %v466, 0.00062330527
        %v483 = vmul.f32 %v467, 0.00062330527
        %v484 = vmul.f32 %v468, 0.00062330527
        %v485 = vmul.f32 %v469, 0.00062330527
        %v486 = vmul.f32 %v470, 0.00062330527
        %v487 = vmul.f32 %v471, 0.00062330527
        %v488 = vmul.f32 %v472, 0.00062330527
        %v489 = vmul.f32 %v473, 0.00062330527
        %v490 = vmul.f32 %v474, 0.00062330527
        %v491 = vmul.f32 %v475, 0.00062330527
        %v492 = vmul.f32 %v476, 0.00062330527
        %v493 = vmul.f32 %v477, 0.00062330527
        %v494 = vmul.f32 %v478, 0.00062330527
        %v495 = vmul.f32 %v479, 0.00062330527
        %v496 = vmul.f32 %v480, 0.00062330527
        %v497 = vmul.f32 %v481, 0.00062330527
        %v498 = vadd.f32 %v450, %v482
        %v499 = vadd.f32 %v451, %v483
        %v500 = vadd.f32 %v452, %v484
        %v501 = vadd.f32 %v453, %v485
        %v502 = vadd.f32 %v454, %v486
        %v503 = vadd.f32 %v455, %v487
        %v504 = vadd.f32 %v456, %v488
        %v505 = vadd.f32 %v457, %v489
        %v506 = vadd.f32 %v458, %v490
        %v507 = vadd.f32 %v459, %v491
        %v508 = vadd.f32 %v460, %v492
        %v509 = vadd.f32 %v461, %v493
        %v510 = vadd.f32 %v462, %v494
        %v511 = vadd.f32 %v463, %v495
        %v512 = vadd.f32 %v464, %v496
        %v513 = vadd.f32 %v465, %v497
        %530 = vrot.lane.b32.xlu0 %v498, 3
        %v531 = vpop.permute.xlu0 %530
        %532 = vrot.lane.b32.xlu0 %v499, 3
        %v533 = vpop.permute.xlu0 %532
        %534 = vrot.lane.b32.xlu0 %v500, 3
        %v535 = vpop.permute.xlu0 %534
        %536 = vrot.lane.b32.xlu0 %v501, 3
        %v537 = vpop.permute.xlu0 %536
        %538 = vrot.lane.b32.xlu0 %v502, 3
        %v539 = vpop.permute.xlu0 %538
        %540 = vrot.lane.b32.xlu0 %v503, 3
        %v541 = vpop.permute.xlu0 %540
        %542 = vrot.lane.b32.xlu0 %v504, 3
        %v543 = vpop.permute.xlu0 %542
        %544 = vrot.lane.b32.xlu0 %v505, 3
        %v545 = vpop.permute.xlu0 %544
        %546 = vrot.lane.b32.xlu0 %v506, 3
        %v547 = vpop.permute.xlu0 %546
        %548 = vrot.lane.b32.xlu0 %v507, 3
        %v549 = vpop.permute.xlu0 %548
        %550 = vrot.lane.b32.xlu0 %v508, 3
        %v551 = vpop.permute.xlu0 %550
        %552 = vrot.lane.b32.xlu0 %v509, 3
        %v553 = vpop.permute.xlu0 %552
        %554 = vrot.lane.b32.xlu0 %v510, 3
        %v555 = vpop.permute.xlu0 %554
        %556 = vrot.lane.b32.xlu0 %v511, 3
        %v557 = vpop.permute.xlu0 %556
        %558 = vrot.lane.b32.xlu0 %v512, 3
        %v559 = vpop.permute.xlu0 %558
        %560 = vrot.lane.b32.xlu0 %v513, 3
        %v561 = vpop.permute.xlu0 %560
        %vm578 = vcmask 1047576
        %579 = vst.msk [vmem:[#allocation3] sm:$0xff] %vm578, %v531
        %vm580 = vcmask 23552
        %581 = vst.msk [vmem:[#allocation3 + $0x8] sm:$0xff] %vm580, %v531
        %582 = vst.msk [vmem:[#allocation3 + $0x10] sm:$0xff] %vm578, %v533
        %583 = vst.msk [vmem:[#allocation3 + $0x18] sm:$0xff] %vm580, %v533
        %584 = vst.msk [vmem:[#allocation3 + $0x20] sm:$0xff] %vm578, %v535
        %585 = vst.msk [vmem:[#allocation3 + $0x28] sm:$0xff] %vm580, %v535
        %586 = vst.msk [vmem:[#allocation3 + $0x30] sm:$0xff] %vm578, %v537
        %587 = vst.msk [vmem:[#allocation3 + $0x38] sm:$0xff] %vm580, %v537
        %588 = vst.msk [vmem:[#allocation3 + $0x40] sm:$0xff] %vm578, %v539
        %589 = vst.msk [vmem:[#allocation3 + $0x48] sm:$0xff] %vm580, %v539
        %590 = vst.msk [vmem:[#allocation3 + $0x50] sm:$0xff] %vm578, %v541
        %591 = vst.msk [vmem:[#allocation3 + $0x58] sm:$0xff] %vm580, %v541
        %592 = vst.msk [vmem:[#allocation3 + $0x60] sm:$0xff] %vm578, %v543
        %593 = vst.msk [vmem:[#allocation3 + $0x68] sm:$0xff] %vm580, %v543
        %594 = vst.msk [vmem:[#allocation3 + $0x70] sm:$0xff] %vm578, %v545
        %595 = vst.msk [vmem:[#allocation3 + $0x78] sm:$0xff] %vm580, %v545
        %596 = vst.msk [vmem:[#allocation3 + $0x80] sm:$0xff] %vm578, %v547
        %597 = vst.msk [vmem:[#allocation3 + $0x88] sm:$0xff] %vm580, %v547
        %598 = vst.msk [vmem:[#allocation3 + $0x90] sm:$0xff] %vm578, %v549
        %599 = vst.msk [vmem:[#allocation3 + $0x98] sm:$0xff] %vm580, %v549
        %600 = vst.msk [vmem:[#allocation3 + $0xa0] sm:$0xff] %vm578, %v551
        %601 = vst.msk [vmem:[#allocation3 + $0xa8] sm:$0xff] %vm580, %v551
        %602 = vst.msk [vmem:[#allocation3 + $0xb0] sm:$0xff] %vm578, %v553
        %603 = vst.msk [vmem:[#allocation3 + $0xb8] sm:$0xff] %vm580, %v553
        %604 = vst.msk [vmem:[#allocation3 + $0xc0] sm:$0xff] %vm578, %v555
        %605 = vst.msk [vmem:[#allocation3 + $0xc8] sm:$0xff] %vm580, %v555
        %606 = vst.msk [vmem:[#allocation3 + $0xd0] sm:$0xff] %vm578, %v557
        %607 = vst.msk [vmem:[#allocation3 + $0xd8] sm:$0xff] %vm580, %v557
        %608 = vst.msk [vmem:[#allocation3 + $0xe0] sm:$0xff] %vm578, %v559
        %609 = vst.msk [vmem:[#allocation3 + $0xe8] sm:$0xff] %vm580, %v559
        %610 = vst.msk [vmem:[#allocation3 + $0xf0] sm:$0xff] %vm578, %v561
        %611 = vst.msk [vmem:[#allocation3 + $0xf8] sm:$0xff] %vm580, %v561
        %vm612 = vcmask 7168
        %613 = vst.msk [vmem:[#allocation3] sm:$0xff] %vm612, %v498
        %614 = vst.msk [vmem:[#allocation3 + $0x10] sm:$0xff] %vm612, %v499
        %615 = vst.msk [vmem:[#allocation3 + $0x20] sm:$0xff] %vm612, %v500
        %616 = vst.msk [vmem:[#allocation3 + $0x30] sm:$0xff] %vm612, %v501
        %617 = vst.msk [vmem:[#allocation3 + $0x40] sm:$0xff] %vm612, %v502
        %618 = vst.msk [vmem:[#allocation3 + $0x50] sm:$0xff] %vm612, %v503
        %619 = vst.msk [vmem:[#allocation3 + $0x60] sm:$0xff] %vm612, %v504
        %620 = vst.msk [vmem:[#allocation3 + $0x70] sm:$0xff] %vm612, %v505
        %621 = vst.msk [vmem:[#allocation3 + $0x80] sm:$0xff] %vm612, %v506
        %622 = vst.msk [vmem:[#allocation3 + $0x90] sm:$0xff] %vm612, %v507
        %623 = vst.msk [vmem:[#allocation3 + $0xa0] sm:$0xff] %vm612, %v508
        %624 = vst.msk [vmem:[#allocation3 + $0xb0] sm:$0xff] %vm612, %v509
        %625 = vst.msk [vmem:[#allocation3 + $0xc0] sm:$0xff] %vm612, %v510
        %626 = vst.msk [vmem:[#allocation3 + $0xd0] sm:$0xff] %vm612, %v511
        %627 = vst.msk [vmem:[#allocation3 + $0xe0] sm:$0xff] %vm612, %v512
        %628 = vst.msk [vmem:[#allocation3 + $0xf0] sm:$0xff] %vm612, %v513
        %629 = vrot.lane.b32.xlu0 %v498, 4
        %v630 = vpop.permute.xlu0 %629
        %631 = vrot.lane.b32.xlu0 %v499, 4
        %v632 = vpop.permute.xlu0 %631
        %633 = vrot.lane.b32.xlu0 %v500, 4
        %v634 = vpop.permute.xlu0 %633
        %635 = vrot.lane.b32.xlu0 %v501, 4
        %v636 = vpop.permute.xlu0 %635
        %637 = vrot.lane.b32.xlu0 %v502, 4
        %v638 = vpop.permute.xlu0 %637
        %639 = vrot.lane.b32.xlu0 %v503, 4
        %v640 = vpop.permute.xlu0 %639
        %641 = vrot.lane.b32.xlu0 %v504, 4
        %v642 = vpop.permute.xlu0 %641
        %643 = vrot.lane.b32.xlu0 %v505, 4
        %v644 = vpop.permute.xlu0 %643
        %645 = vrot.lane.b32.xlu0 %v506, 4
        %v646 = vpop.permute.xlu0 %645
        %647 = vrot.lane.b32.xlu0 %v507, 4
        %v648 = vpop.permute.xlu0 %647
        %649 = vrot.lane.b32.xlu0 %v508, 4
        %v650 = vpop.permute.xlu0 %649
        %651 = vrot.lane.b32.xlu0 %v509, 4
        %v652 = vpop.permute.xlu0 %651
        %653 = vrot.lane.b32.xlu0 %v510, 4
        %v654 = vpop.permute.xlu0 %653
        %655 = vrot.lane.b32.xlu0 %v511, 4
        %v656 = vpop.permute.xlu0 %655
        %657 = vrot.lane.b32.xlu0 %v512, 4
        %v658 = vpop.permute.xlu0 %657
        %659 = vrot.lane.b32.xlu0 %v513, 4
        %v660 = vpop.permute.xlu0 %659
        %vm677 = vcmask 31768
        %678 = vst.msk [vmem:[#allocation3 + $0x8] sm:$0xff] %vm677, %v630
        %679 = vst.msk [vmem:[#allocation3 + $0x18] sm:$0xff] %vm677, %v632
        %680 = vst.msk [vmem:[#allocation3 + $0x28] sm:$0xff] %vm677, %v634
        %681 = vst.msk [vmem:[#allocation3 + $0x38] sm:$0xff] %vm677, %v636
        %682 = vst.msk [vmem:[#allocation3 + $0x48] sm:$0xff] %vm677, %v638
        %683 = vst.msk [vmem:[#allocation3 + $0x58] sm:$0xff] %vm677, %v640
        %684 = vst.msk [vmem:[#allocation3 + $0x68] sm:$0xff] %vm677, %v642
        %685 = vst.msk [vmem:[#allocation3 + $0x78] sm:$0xff] %vm677, %v644
        %686 = vst.msk [vmem:[#allocation3 + $0x88] sm:$0xff] %vm677, %v646
        %687 = vst.msk [vmem:[#allocation3 + $0x98] sm:$0xff] %vm677, %v648
        %688 = vst.msk [vmem:[#allocation3 + $0xa8] sm:$0xff] %vm677, %v650
        %689 = vst.msk [vmem:[#allocation3 + $0xb8] sm:$0xff] %vm677, %v652
        %690 = vst.msk [vmem:[#allocation3 + $0xc8] sm:$0xff] %vm677, %v654
        %691 = vst.msk [vmem:[#allocation3 + $0xd8] sm:$0xff] %vm677, %v656
        %692 = vst.msk [vmem:[#allocation3 + $0xe8] sm:$0xff] %vm677, %v658
        %693 = vst.msk [vmem:[#allocation3 + $0xf8] sm:$0xff] %vm677, %v660
        %694 = vrot.lane.b32.xlu0 %v498, 1
        %v695 = vpop.permute.xlu0 %694
        %696 = vrot.lane.b32.xlu0 %v499, 1
        %v697 = vpop.permute.xlu0 %696
        %698 = vrot.lane.b32.xlu0 %v500, 1
        %v699 = vpop.permute.xlu0 %698
        %700 = vrot.lane.b32.xlu0 %v501, 1
        %v701 = vpop.permute.xlu0 %700
        %702 = vrot.lane.b32.xlu0 %v502, 1
        %v703 = vpop.permute.xlu0 %702
        %704 = vrot.lane.b32.xlu0 %v503, 1
        %v705 = vpop.permute.xlu0 %704
        %706 = vrot.lane.b32.xlu0 %v504, 1
        %v707 = vpop.permute.xlu0 %706
        %708 = vrot.lane.b32.xlu0 %v505, 1
        %v709 = vpop.permute.xlu0 %708
        %710 = vrot.lane.b32.xlu0 %v506, 1
        %v711 = vpop.permute.xlu0 %710
        %712 = vrot.lane.b32.xlu0 %v507, 1
        %v713 = vpop.permute.xlu0 %712
        %714 = vrot.lane.b32.xlu0 %v508, 1
        %v715 = vpop.permute.xlu0 %714
        %716 = vrot.lane.b32.xlu0 %v509, 1
        %v717 = vpop.permute.xlu0 %716
        %718 = vrot.lane.b32.xlu0 %v510, 1
        %v719 = vpop.permute.xlu0 %718
        %720 = vrot.lane.b32.xlu0 %v511, 1
        %v721 = vpop.permute.xlu0 %720
        %722 = vrot.lane.b32.xlu0 %v512, 1
        %v723 = vpop.permute.xlu0 %722
        %724 = vrot.lane.b32.xlu0 %v513, 1
        %v725 = vpop.permute.xlu0 %724
        %vm742 = vcmask 15368
        %743 = vst.msk [vmem:[#allocation3] sm:$0xff] %vm742, %v695
        %744 = vst.msk [vmem:[#allocation3 + $0x10] sm:$0xff] %vm742, %v697
        %745 = vst.msk [vmem:[#allocation3 + $0x20] sm:$0xff] %vm742, %v699
        %746 = vst.msk [vmem:[#allocation3 + $0x30] sm:$0xff] %vm742, %v701
        %747 = vst.msk [vmem:[#allocation3 + $0x40] sm:$0xff] %vm742, %v703
        %748 = vst.msk [vmem:[#allocation3 + $0x50] sm:$0xff] %vm742, %v705
        %749 = vst.msk [vmem:[#allocation3 + $0x60] sm:$0xff] %vm742, %v707
        %750 = vst.msk [vmem:[#allocation3 + $0x70] sm:$0xff] %vm742, %v709
        %751 = vst.msk [vmem:[#allocation3 + $0x80] sm:$0xff] %vm742, %v711
        %752 = vst.msk [vmem:[#allocation3 + $0x90] sm:$0xff] %vm742, %v713
        %753 = vst.msk [vmem:[#allocation3 + $0xa0] sm:$0xff] %vm742, %v715
        %754 = vst.msk [vmem:[#allocation3 + $0xb0] sm:$0xff] %vm742, %v717
        %755 = vst.msk [vmem:[#allocation3 + $0xc0] sm:$0xff] %vm742, %v719
        %756 = vst.msk [vmem:[#allocation3 + $0xd0] sm:$0xff] %vm742, %v721
        %757 = vst.msk [vmem:[#allocation3 + $0xe0] sm:$0xff] %vm742, %v723
        %758 = vst.msk [vmem:[#allocation3 + $0xf0] sm:$0xff] %vm742, %v725
        %759 = vrot.lane.b32.xlu0 %v498, 5
        %v760 = vpop.permute.xlu0 %759
        %761 = vrot.lane.b32.xlu0 %v499, 5
        %v762 = vpop.permute.xlu0 %761
        %763 = vrot.lane.b32.xlu0 %v500, 5
        %v764 = vpop.permute.xlu0 %763
        %765 = vrot.lane.b32.xlu0 %v501, 5
        %v766 = vpop.permute.xlu0 %765
        %767 = vrot.lane.b32.xlu0 %v502, 5
        %v768 = vpop.permute.xlu0 %767
        %769 = vrot.lane.b32.xlu0 %v503, 5
        %v770 = vpop.permute.xlu0 %769
        %771 = vrot.lane.b32.xlu0 %v504, 5
        %v772 = vpop.permute.xlu0 %771
        %773 = vrot.lane.b32.xlu0 %v505, 5
        %v774 = vpop.permute.xlu0 %773
        %775 = vrot.lane.b32.xlu0 %v506, 5
        %v776 = vpop.permute.xlu0 %775
        %777 = vrot.lane.b32.xlu0 %v507, 5
        %v778 = vpop.permute.xlu0 %777
        %779 = vrot.lane.b32.xlu0 %v508, 5
        %v780 = vpop.permute.xlu0 %779
        %781 = vrot.lane.b32.xlu0 %v509, 5
        %v782 = vpop.permute.xlu0 %781
        %783 = vrot.lane.b32.xlu0 %v510, 5
        %v784 = vpop.permute.xlu0 %783
        %785 = vrot.lane.b32.xlu0 %v511, 5
        %v786 = vpop.permute.xlu0 %785
        %787 = vrot.lane.b32.xlu0 %v512, 5
        %v788 = vpop.permute.xlu0 %787
        %789 = vrot.lane.b32.xlu0 %v513, 5
        %v790 = vpop.permute.xlu0 %789
        %vm807 = vcmask 39968
        %808 = vst.msk [vmem:[#allocation3 + $0x8] sm:$0xff] %vm807, %v760
        %809 = vst.msk [vmem:[#allocation3 + $0x18] sm:$0xff] %vm807, %v762
        %810 = vst.msk [vmem:[#allocation3 + $0x28] sm:$0xff] %vm807, %v764
        %811 = vst.msk [vmem:[#allocation3 + $0x38] sm:$0xff] %vm807, %v766
        %812 = vst.msk [vmem:[#allocation3 + $0x48] sm:$0xff] %vm807, %v768
        %813 = vst.msk [vmem:[#allocation3 + $0x58] sm:$0xff] %vm807, %v770
        %814 = vst.msk [vmem:[#allocation3 + $0x68] sm:$0xff] %vm807, %v772
        %815 = vst.msk [vmem:[#allocation3 + $0x78] sm:$0xff] %vm807, %v774
        %816 = vst.msk [vmem:[#allocation3 + $0x88] sm:$0xff] %vm807, %v776
        %817 = vst.msk [vmem:[#allocation3 + $0x98] sm:$0xff] %vm807, %v778
        %818 = vst.msk [vmem:[#allocation3 + $0xa8] sm:$0xff] %vm807, %v780
        %819 = vst.msk [vmem:[#allocation3 + $0xb8] sm:$0xff] %vm807, %v782
        %820 = vst.msk [vmem:[#allocation3 + $0xc8] sm:$0xff] %vm807, %v784
        %821 = vst.msk [vmem:[#allocation3 + $0xd8] sm:$0xff] %vm807, %v786
        %822 = vst.msk [vmem:[#allocation3 + $0xe8] sm:$0xff] %vm807, %v788
        %823 = vst.msk [vmem:[#allocation3 + $0xf8] sm:$0xff] %vm807, %v790
        %824 = vrot.lane.b32.xlu0 %v498, 2
        %v825 = vpop.permute.xlu0 %824
        %826 = vrot.lane.b32.xlu0 %v499, 2
        %v827 = vpop.permute.xlu0 %826
        %828 = vrot.lane.b32.xlu0 %v500, 2
        %v829 = vpop.permute.xlu0 %828
        %830 = vrot.lane.b32.xlu0 %v501, 2
        %v831 = vpop.permute.xlu0 %830
        %832 = vrot.lane.b32.xlu0 %v502, 2
        %v833 = vpop.permute.xlu0 %832
        %834 = vrot.lane.b32.xlu0 %v503, 2
        %v835 = vpop.permute.xlu0 %834
        %836 = vrot.lane.b32.xlu0 %v504, 2
        %v837 = vpop.permute.xlu0 %836
        %838 = vrot.lane.b32.xlu0 %v505, 2
        %v839 = vpop.permute.xlu0 %838
        %840 = vrot.lane.b32.xlu0 %v506, 2
        %v841 = vpop.permute.xlu0 %840
        %842 = vrot.lane.b32.xlu0 %v507, 2
        %v843 = vpop.permute.xlu0 %842
        %844 = vrot.lane.b32.xlu0 %v508, 2
        %v845 = vpop.permute.xlu0 %844
        %846 = vrot.lane.b32.xlu0 %v509, 2
        %v847 = vpop.permute.xlu0 %846
        %848 = vrot.lane.b32.xlu0 %v510, 2
        %v849 = vpop.permute.xlu0 %848
        %850 = vrot.lane.b32.xlu0 %v511, 2
        %v851 = vpop.permute.xlu0 %850
        %852 = vrot.lane.b32.xlu0 %v512, 2
        %v853 = vpop.permute.xlu0 %852
        %854 = vrot.lane.b32.xlu0 %v513, 2
        %v855 = vpop.permute.xlu0 %854
        %vm872 = vcmask 23568
        %873 = vst.msk [vmem:[#allocation3] sm:$0xff] %vm872, %v825
        %874 = vst.msk [vmem:[#allocation3 + $0x10] sm:$0xff] %vm872, %v827
        %875 = vst.msk [vmem:[#allocation3 + $0x20] sm:$0xff] %vm872, %v829
        %876 = vst.msk [vmem:[#allocation3 + $0x30] sm:$0xff] %vm872, %v831
        %877 = vst.msk [vmem:[#allocation3 + $0x40] sm:$0xff] %vm872, %v833
        %878 = vst.msk [vmem:[#allocation3 + $0x50] sm:$0xff] %vm872, %v835
        %879 = vst.msk [vmem:[#allocation3 + $0x60] sm:$0xff] %vm872, %v837
        %880 = vst.msk [vmem:[#allocation3 + $0x70] sm:$0xff] %vm872, %v839
        %881 = vst.msk [vmem:[#allocation3 + $0x80] sm:$0xff] %vm872, %v841
        %882 = vst.msk [vmem:[#allocation3 + $0x90] sm:$0xff] %vm872, %v843
        %883 = vst.msk [vmem:[#allocation3 + $0xa0] sm:$0xff] %vm872, %v845
        %884 = vst.msk [vmem:[#allocation3 + $0xb0] sm:$0xff] %vm872, %v847
        %885 = vst.msk [vmem:[#allocation3 + $0xc0] sm:$0xff] %vm872, %v849
        %886 = vst.msk [vmem:[#allocation3 + $0xd0] sm:$0xff] %vm872, %v851
        %887 = vst.msk [vmem:[#allocation3 + $0xe0] sm:$0xff] %vm872, %v853
        %888 = vst.msk [vmem:[#allocation3 + $0xf0] sm:$0xff] %vm872, %v855
        %889 = vrot.lane.b32.xlu0 %v498, 6
        %v890 = vpop.permute.xlu0 %889
        %891 = vrot.lane.b32.xlu0 %v499, 6
        %v892 = vpop.permute.xlu0 %891
        %893 = vrot.lane.b32.xlu0 %v500, 6
        %v894 = vpop.permute.xlu0 %893
        %895 = vrot.lane.b32.xlu0 %v501, 6
        %v896 = vpop.permute.xlu0 %895
        %897 = vrot.lane.b32.xlu0 %v502, 6
        %v898 = vpop.permute.xlu0 %897
        %899 = vrot.lane.b32.xlu0 %v503, 6
        %v900 = vpop.permute.xlu0 %899
        %901 = vrot.lane.b32.xlu0 %v504, 6
        %v902 = vpop.permute.xlu0 %901
        %903 = vrot.lane.b32.xlu0 %v505, 6
        %v904 = vpop.permute.xlu0 %903
        %905 = vrot.lane.b32.xlu0 %v506, 6
        %v906 = vpop.permute.xlu0 %905
        %907 = vrot.lane.b32.xlu0 %v507, 6
        %v908 = vpop.permute.xlu0 %907
        %909 = vrot.lane.b32.xlu0 %v508, 6
        %v910 = vpop.permute.xlu0 %909
        %911 = vrot.lane.b32.xlu0 %v509, 6
        %v912 = vpop.permute.xlu0 %911
        %913 = vrot.lane.b32.xlu0 %v510, 6
        %v914 = vpop.permute.xlu0 %913
        %915 = vrot.lane.b32.xlu0 %v511, 6
        %v916 = vpop.permute.xlu0 %915
        %917 = vrot.lane.b32.xlu0 %v512, 6
        %v918 = vpop.permute.xlu0 %917
        %919 = vrot.lane.b32.xlu0 %v513, 6
        %v920 = vpop.permute.xlu0 %919
        %vm937 = vcmask 48168
        %938 = vst.msk [vmem:[#allocation3 + $0x8] sm:$0xff] %vm937, %v890
        %939 = vst.msk [vmem:[#allocation3 + $0x18] sm:$0xff] %vm937, %v892
        %940 = vst.msk [vmem:[#allocation3 + $0x28] sm:$0xff] %vm937, %v894
        %941 = vst.msk [vmem:[#allocation3 + $0x38] sm:$0xff] %vm937, %v896
        %942 = vst.msk [vmem:[#allocation3 + $0x48] sm:$0xff] %vm937, %v898
        %943 = vst.msk [vmem:[#allocation3 + $0x58] sm:$0xff] %vm937, %v900
        %944 = vst.msk [vmem:[#allocation3 + $0x68] sm:$0xff] %vm937, %v902
        %945 = vst.msk [vmem:[#allocation3 + $0x78] sm:$0xff] %vm937, %v904
        %946 = vst.msk [vmem:[#allocation3 + $0x88] sm:$0xff] %vm937, %v906
        %947 = vst.msk [vmem:[#allocation3 + $0x98] sm:$0xff] %vm937, %v908
        %948 = vst.msk [vmem:[#allocation3 + $0xa8] sm:$0xff] %vm937, %v910
        %949 = vst.msk [vmem:[#allocation3 + $0xb8] sm:$0xff] %vm937, %v912
        %950 = vst.msk [vmem:[#allocation3 + $0xc8] sm:$0xff] %vm937, %v914
        %951 = vst.msk [vmem:[#allocation3 + $0xd8] sm:$0xff] %vm937, %v916
        %952 = vst.msk [vmem:[#allocation3 + $0xe8] sm:$0xff] %vm937, %v918
        %953 = vst.msk [vmem:[#allocation3 + $0xf8] sm:$0xff] %vm937, %v920
        %v954 = vld [vmem:[#allocation3] sm:$0xff]
        %v955 = vld [vmem:[#allocation3 + $0x10] sm:$0xff]
        %v956 = vld [vmem:[#allocation3 + $0x20] sm:$0xff]
        %v957 = vld [vmem:[#allocation3 + $0x30] sm:$0xff]
        %v958 = vld [vmem:[#allocation3 + $0x40] sm:$0xff]
        %v959 = vld [vmem:[#allocation3 + $0x50] sm:$0xff]
        %v960 = vld [vmem:[#allocation3 + $0x60] sm:$0xff]
        %v961 = vld [vmem:[#allocation3 + $0x70] sm:$0xff]
        %v962 = vld [vmem:[#allocation3 + $0x80] sm:$0xff]
        %v963 = vld [vmem:[#allocation3 + $0x90] sm:$0xff]
        %v964 = vld [vmem:[#allocation3 + $0xa0] sm:$0xff]
        %v965 = vld [vmem:[#allocation3 + $0xb0] sm:$0xff]
        %v966 = vld [vmem:[#allocation3 + $0xc0] sm:$0xff]
        %v967 = vld [vmem:[#allocation3 + $0xd0] sm:$0xff]
        %v968 = vld [vmem:[#allocation3 + $0xe0] sm:$0xff]
        %v969 = vld [vmem:[#allocation3 + $0xf0] sm:$0xff]
        %v970 = vmul.f32 %v954, 0.00062330527
        %v971 = vmul.f32 %v955, 0.00062330527
        %v972 = vmul.f32 %v956, 0.00062330527
        %v973 = vmul.f32 %v957, 0.00062330527
        %v974 = vmul.f32 %v958, 0.00062330527
        %v975 = vmul.f32 %v959, 0.00062330527
        %v976 = vmul.f32 %v960, 0.00062330527
        %v977 = vmul.f32 %v961, 0.00062330527
        %v978 = vmul.f32 %v962, 0.00062330527
        %v979 = vmul.f32 %v963, 0.00062330527
        %v980 = vmul.f32 %v964, 0.00062330527
        %v981 = vmul.f32 %v965, 0.00062330527
        %v982 = vmul.f32 %v966, 0.00062330527
        %v983 = vmul.f32 %v967, 0.00062330527
        %v984 = vmul.f32 %v968, 0.00062330527
        %v985 = vmul.f32 %v969, 0.00062330527
        %v986 = vld [vmem:[#allocation3 + $0x8] sm:$0xff]
        %v987 = vld [vmem:[#allocation3 + $0x18] sm:$0xff]
        %v988 = vld [vmem:[#allocation3 + $0x28] sm:$0xff]
        %v989 = vld [vmem:[#allocation3 + $0x38] sm:$0xff]
        %v990 = vld [vmem:[#allocation3 + $0x48] sm:$0xff]
        %v991 = vld [vmem:[#allocation3 + $0x58] sm:$0xff]
        %v992 = vld [vmem:[#allocation3 + $0x68] sm:$0xff]
        %v993 = vld [vmem:[#allocation3 + $0x78] sm:$0xff]
        %v994 = vld [vmem:[#allocation3 + $0x88] sm:$0xff]
        %v995 = vld [vmem:[#allocation3 + $0x98] sm:$0xff]
        %v996 = vld [vmem:[#allocation3 + $0xa8] sm:$0xff]
        %v997 = vld [vmem:[#allocation3 + $0xb8] sm:$0xff]
        %v998 = vld [vmem:[#allocation3 + $0xc8] sm:$0xff]
        %v999 = vld [vmem:[#allocation3 + $0xd8] sm:$0xff]
        %v1000 = vld [vmem:[#allocation3 + $0xe8] sm:$0xff]
        %v1001 = vld [vmem:[#allocation3 + $0xf8] sm:$0xff]
        %v1002 = vmul.f32 %v954, 0.030985864
        %v1003 = vmul.f32 %v986, 0.030985864
        %v1004 = vmul.f32 %v955, 0.030985864
        %v1005 = vmul.f32 %v987, 0.030985864
        %v1006 = vmul.f32 %v956, 0.030985864
        %v1007 = vmul.f32 %v988, 0.030985864
        %v1008 = vmul.f32 %v957, 0.030985864
        %v1009 = vmul.f32 %v989, 0.030985864
        %v1010 = vmul.f32 %v958, 0.030985864
        %v1011 = vmul.f32 %v990, 0.030985864
        %v1012 = vmul.f32 %v959, 0.030985864
        %v1013 = vmul.f32 %v991, 0.030985864
        %v1014 = vmul.f32 %v960, 0.030985864
        %v1015 = vmul.f32 %v992, 0.030985864
        %v1016 = vmul.f32 %v961, 0.030985864
        %v1017 = vmul.f32 %v993, 0.030985864
        %v1018 = vmul.f32 %v962, 0.030985864
        %v1019 = vmul.f32 %v994, 0.030985864
        %v1020 = vmul.f32 %v963, 0.030985864
        %v1021 = vmul.f32 %v995, 0.030985864
        %v1022 = vmul.f32 %v964, 0.030985864
        %v1023 = vmul.f32 %v996, 0.030985864
        %v1024 = vmul.f32 %v965, 0.030985864
        %v1025 = vmul.f32 %v997, 0.030985864
        %v1026 = vmul.f32 %v966, 0.030985864
        %v1027 = vmul.f32 %v998, 0.030985864
        %v1028 = vmul.f32 %v967, 0.030985864
        %v1029 = vmul.f32 %v999, 0.030985864
        %v1030 = vmul.f32 %v968, 0.030985864
        %v1031 = vmul.f32 %v1000, 0.030985864
        %v1032 = vmul.f32 %v969, 0.030985864
        %v1033 = vmul.f32 %v1001, 0.030985864
        %1066 = vrot.lane.b32.xlu0 %v1002, 127
        %v1067 = vpop.permute.xlu0 %1066
        %1068 = vrot.lane.b32.xlu0 %v1003, 127
        %v1069 = vpop.permute.xlu0 %1068
        %1070 = vrot.lane.b32.xlu0 %v1004, 127
        %v1071 = vpop.permute.xlu0 %1070
        %1072 = vrot.lane.b32.xlu0 %v1005, 127
        %v1073 = vpop.permute.xlu0 %1072
        %1074 = vrot.lane.b32.xlu0 %v1006, 127
        %v1075 = vpop.permute.xlu0 %1074
        %1076 = vrot.lane.b32.xlu0 %v1007, 127
        %v1077 = vpop.permute.xlu0 %1076
        %1078 = vrot.lane.b32.xlu0 %v1008, 127
        %v1079 = vpop.permute.xlu0 %1078
        %1080 = vrot.lane.b32.xlu0 %v1009, 127
        %v1081 = vpop.permute.xlu0 %1080
        %1082 = vrot.lane.b32.xlu0 %v1010, 127
        %v1083 = vpop.permute.xlu0 %1082
        %1084 = vrot.lane.b32.xlu0 %v1011, 127
        %v1085 = vpop.permute.xlu0 %1084
        %1086 = vrot.lane.b32.xlu0 %v1012, 127
        %v1087 = vpop.permute.xlu0 %1086
        %1088 = vrot.lane.b32.xlu0 %v1013, 127
        %v1089 = vpop.permute.xlu0 %1088
        %1090 = vrot.lane.b32.xlu0 %v1014, 127
        %v1091 = vpop.permute.xlu0 %1090
        %1092 = vrot.lane.b32.xlu0 %v1015, 127
        %v1093 = vpop.permute.xlu0 %1092
        %1094 = vrot.lane.b32.xlu0 %v1016, 127
        %v1095 = vpop.permute.xlu0 %1094
        %1096 = vrot.lane.b32.xlu0 %v1017, 127
        %v1097 = vpop.permute.xlu0 %1096
        %1098 = vrot.lane.b32.xlu0 %v1018, 127
        %v1099 = vpop.permute.xlu0 %1098
        %1100 = vrot.lane.b32.xlu0 %v1019, 127
        %v1101 = vpop.permute.xlu0 %1100
        %1102 = vrot.lane.b32.xlu0 %v1020, 127
        %v1103 = vpop.permute.xlu0 %1102
        %1104 = vrot.lane.b32.xlu0 %v1021, 127
        %v1105 = vpop.permute.xlu0 %1104
        %1106 = vrot.lane.b32.xlu0 %v1022, 127
        %v1107 = vpop.permute.xlu0 %1106
        %1108 = vrot.lane.b32.xlu0 %v1023, 127
        %v1109 = vpop.permute.xlu0 %1108
        %1110 = vrot.lane.b32.xlu0 %v1024, 127
        %v1111 = vpop.permute.xlu0 %1110
        %1112 = vrot.lane.b32.xlu0 %v1025, 127
        %v1113 = vpop.permute.xlu0 %1112
        %1114 = vrot.lane.b32.xlu0 %v1026, 127
        %v1115 = vpop.permute.xlu0 %1114
        %1116 = vrot.lane.b32.xlu0 %v1027, 127
        %v1117 = vpop.permute.xlu0 %1116
        %1118 = vrot.lane.b32.xlu0 %v1028, 127
        %v1119 = vpop.permute.xlu0 %1118
        %1120 = vrot.lane.b32.xlu0 %v1029, 127
        %v1121 = vpop.permute.xlu0 %1120
        %1122 = vrot.lane.b32.xlu0 %v1030, 127
        %v1123 = vpop.permute.xlu0 %1122
        %1124 = vrot.lane.b32.xlu0 %v1031, 127
        %v1125 = vpop.permute.xlu0 %1124
        %1126 = vrot.lane.b32.xlu0 %v1032, 127
        %v1127 = vpop.permute.xlu0 %1126
        %1128 = vrot.lane.b32.xlu0 %v1033, 127
        %v1129 = vpop.permute.xlu0 %1128
        %vm1130 = vcmask 1039360
        %v1131 = vsel %vm1130, %v1067, %v1069
        %v1132 = vsel %vm1130, %v1071, %v1073
        %v1133 = vsel %vm1130, %v1075, %v1077
        %v1134 = vsel %vm1130, %v1079, %v1081
        %v1135 = vsel %vm1130, %v1083, %v1085
        %v1136 = vsel %vm1130, %v1087, %v1089
        %v1137 = vsel %vm1130, %v1091, %v1093
        %v1138 = vsel %vm1130, %v1095, %v1097
        %v1139 = vsel %vm1130, %v1099, %v1101
        %v1140 = vsel %vm1130, %v1103, %v1105
        %v1141 = vsel %vm1130, %v1107, %v1109
        %v1142 = vsel %vm1130, %v1111, %v1113
        %v1143 = vsel %vm1130, %v1115, %v1117
        %v1144 = vsel %vm1130, %v1119, %v1121
        %v1145 = vsel %vm1130, %v1123, %v1125
        %v1146 = vsel %vm1130, %v1127, %v1129
        %v1163 = vadd.f32 %v970, %v1131
        %v1164 = vadd.f32 %v971, %v1132
        %v1165 = vadd.f32 %v972, %v1133
        %v1166 = vadd.f32 %v973, %v1134
        %v1167 = vadd.f32 %v974, %v1135
        %v1168 = vadd.f32 %v975, %v1136
        %v1169 = vadd.f32 %v976, %v1137
        %v1170 = vadd.f32 %v977, %v1138
        %v1171 = vadd.f32 %v978, %v1139
        %v1172 = vadd.f32 %v979, %v1140
        %v1173 = vadd.f32 %v980, %v1141
        %v1174 = vadd.f32 %v981, %v1142
        %v1175 = vadd.f32 %v982, %v1143
        %v1176 = vadd.f32 %v983, %v1144
        %v1177 = vadd.f32 %v984, %v1145
        %v1178 = vadd.f32 %v985, %v1146
        %v1179 = vmul.f32 %v954, 0.32288012
        %v1180 = vmul.f32 %v986, 0.32288012
        %v1181 = vmul.f32 %v955, 0.32288012
        %v1182 = vmul.f32 %v987, 0.32288012
        %v1183 = vmul.f32 %v956, 0.32288012
        %v1184 = vmul.f32 %v988, 0.32288012
        %v1185 = vmul.f32 %v957, 0.32288012
        %v1186 = vmul.f32 %v989, 0.32288012
        %v1187 = vmul.f32 %v958, 0.32288012
        %v1188 = vmul.f32 %v990, 0.32288012
        %v1189 = vmul.f32 %v959, 0.32288012
        %v1190 = vmul.f32 %v991, 0.32288012
        %v1191 = vmul.f32 %v960, 0.32288012
        %v1192 = vmul.f32 %v992, 0.32288012
        %v1193 = vmul.f32 %v961, 0.32288012
        %v1194 = vmul.f32 %v993, 0.32288012
        %v1195 = vmul.f32 %v962, 0.32288012
        %v1196 = vmul.f32 %v994, 0.32288012
        %v1197 = vmul.f32 %v963, 0.32288012
        %v1198 = vmul.f32 %v995, 0.32288012
        %v1199 = vmul.f32 %v964, 0.32288012
        %v1200 = vmul.f32 %v996, 0.32288012
        %v1201 = vmul.f32 %v965, 0.32288012
        %v1202 = vmul.f32 %v997, 0.32288012
        %v1203 = vmul.f32 %v966, 0.32288012
        %v1204 = vmul.f32 %v998, 0.32288012
        %v1205 = vmul.f32 %v967, 0.32288012
        %v1206 = vmul.f32 %v999, 0.32288012
        %v1207 = vmul.f32 %v968, 0.32288012
        %v1208 = vmul.f32 %v1000, 0.32288012
        %v1209 = vmul.f32 %v969, 0.32288012
        %v1210 = vmul.f32 %v1001, 0.32288012
        %1243 = vrot.lane.b32.xlu0 %v1179, 126
        %v1244 = vpop.permute.xlu0 %1243
        %1245 = vrot.lane.b32.xlu0 %v1180, 126
        %v1246 = vpop.permute.xlu0 %1245
        %1247 = vrot.lane.b32.xlu0 %v1181, 126
        %v1248 = vpop.permute.xlu0 %1247
        %1249 = vrot.lane.b32.xlu0 %v1182, 126
        %v1250 = vpop.permute.xlu0 %1249
        %1251 = vrot.lane.b32.xlu0 %v1183, 126
        %v1252 = vpop.permute.xlu0 %1251
        %1253 = vrot.lane.b32.xlu0 %v1184, 126
        %v1254 = vpop.permute.xlu0 %1253
        %1255 = vrot.lane.b32.xlu0 %v1185, 126
        %v1256 = vpop.permute.xlu0 %1255
        %1257 = vrot.lane.b32.xlu0 %v1186, 126
        %v1258 = vpop.permute.xlu0 %1257
        %1259 = vrot.lane.b32.xlu0 %v1187, 126
        %v1260 = vpop.permute.xlu0 %1259
        %1261 = vrot.lane.b32.xlu0 %v1188, 126
        %v1262 = vpop.permute.xlu0 %1261
        %1263 = vrot.lane.b32.xlu0 %v1189, 126
        %v1264 = vpop.permute.xlu0 %1263
        %1265 = vrot.lane.b32.xlu0 %v1190, 126
        %v1266 = vpop.permute.xlu0 %1265
        %1267 = vrot.lane.b32.xlu0 %v1191, 126
        %v1268 = vpop.permute.xlu0 %1267
        %1269 = vrot.lane.b32.xlu0 %v1192, 126
        %v1270 = vpop.permute.xlu0 %1269
        %1271 = vrot.lane.b32.xlu0 %v1193, 126
        %v1272 = vpop.permute.xlu0 %1271
        %1273 = vrot.lane.b32.xlu0 %v1194, 126
        %v1274 = vpop.permute.xlu0 %1273
        %1275 = vrot.lane.b32.xlu0 %v1195, 126
        %v1276 = vpop.permute.xlu0 %1275
        %1277 = vrot.lane.b32.xlu0 %v1196, 126
        %v1278 = vpop.permute.xlu0 %1277
        %1279 = vrot.lane.b32.xlu0 %v1197, 126
        %v1280 = vpop.permute.xlu0 %1279
        %1281 = vrot.lane.b32.xlu0 %v1198, 126
        %v1282 = vpop.permute.xlu0 %1281
        %1283 = vrot.lane.b32.xlu0 %v1199, 126
        %v1284 = vpop.permute.xlu0 %1283
        %1285 = vrot.lane.b32.xlu0 %v1200, 126
        %v1286 = vpop.permute.xlu0 %1285
        %1287 = vrot.lane.b32.xlu0 %v1201, 126
        %v1288 = vpop.permute.xlu0 %1287
        %1289 = vrot.lane.b32.xlu0 %v1202, 126
        %v1290 = vpop.permute.xlu0 %1289
        %1291 = vrot.lane.b32.xlu0 %v1203, 126
        %v1292 = vpop.permute.xlu0 %1291
        %1293 = vrot.lane.b32.xlu0 %v1204, 126
        %v1294 = vpop.permute.xlu0 %1293
        %1295 = vrot.lane.b32.xlu0 %v1205, 126
        %v1296 = vpop.permute.xlu0 %1295
        %1297 = vrot.lane.b32.xlu0 %v1206, 126
        %v1298 = vpop.permute.xlu0 %1297
        %1299 = vrot.lane.b32.xlu0 %v1207, 126
        %v1300 = vpop.permute.xlu0 %1299
        %1301 = vrot.lane.b32.xlu0 %v1208, 126
        %v1302 = vpop.permute.xlu0 %1301
        %1303 = vrot.lane.b32.xlu0 %v1209, 126
        %v1304 = vpop.permute.xlu0 %1303
        %1305 = vrot.lane.b32.xlu0 %v1210, 126
        %v1306 = vpop.permute.xlu0 %1305
        %vm1307 = vcmask 1031168
        %v1308 = vsel %vm1307, %v1244, %v1246
        %v1309 = vsel %vm1307, %v1248, %v1250
        %v1310 = vsel %vm1307, %v1252, %v1254
        %v1311 = vsel %vm1307, %v1256, %v1258
        %v1312 = vsel %vm1307, %v1260, %v1262
        %v1313 = vsel %vm1307, %v1264, %v1266
        %v1314 = vsel %vm1307, %v1268, %v1270
        %v1315 = vsel %vm1307, %v1272, %v1274
        %v1316 = vsel %vm1307, %v1276, %v1278
        %v1317 = vsel %vm1307, %v1280, %v1282
        %v1318 = vsel %vm1307, %v1284, %v1286
        %v1319 = vsel %vm1307, %v1288, %v1290
        %v1320 = vsel %vm1307, %v1292, %v1294
        %v1321 = vsel %vm1307, %v1296, %v1298
        %v1322 = vsel %vm1307, %v1300, %v1302
        %v1323 = vsel %vm1307, %v1304, %v1306
        %v1340 = vadd.f32 %v1163, %v1308
        %v1341 = vadd.f32 %v1164, %v1309
        %v1342 = vadd.f32 %v1165, %v1310
        %v1343 = vadd.f32 %v1166, %v1311
        %v1344 = vadd.f32 %v1167, %v1312
        %v1345 = vadd.f32 %v1168, %v1313
        %v1346 = vadd.f32 %v1169, %v1314
        %v1347 = vadd.f32 %v1170, %v1315
        %v1348 = vadd.f32 %v1171, %v1316
        %v1349 = vadd.f32 %v1172, %v1317
        %v1350 = vadd.f32 %v1173, %v1318
        %v1351 = vadd.f32 %v1174, %v1319
        %v1352 = vadd.f32 %v1175, %v1320
        %v1353 = vadd.f32 %v1176, %v1321
        %v1354 = vadd.f32 %v1177, %v1322
        %v1355 = vadd.f32 %v1178, %v1323
        %v1356 = vmul.f32 %v954, 0.705235
        %v1357 = vmul.f32 %v986, 0.705235
        %v1358 = vmul.f32 %v955, 0.705235
        %v1359 = vmul.f32 %v987, 0.705235
        %v1360 = vmul.f32 %v956, 0.705235
        %v1361 = vmul.f32 %v988, 0.705235
        %v1362 = vmul.f32 %v957, 0.705235
        %v1363 = vmul.f32 %v989, 0.705235
        %v1364 = vmul.f32 %v958, 0.705235
        %v1365 = vmul.f32 %v990, 0.705235
        %v1366 = vmul.f32 %v959, 0.705235
        %v1367 = vmul.f32 %v991, 0.705235
        %v1368 = vmul.f32 %v960, 0.705235
        %v1369 = vmul.f32 %v992, 0.705235
        %v1370 = vmul.f32 %v961, 0.705235
        %v1371 = vmul.f32 %v993, 0.705235
        %v1372 = vmul.f32 %v962, 0.705235
        %v1373 = vmul.f32 %v994, 0.705235
        %v1374 = vmul.f32 %v963, 0.705235
        %v1375 = vmul.f32 %v995, 0.705235
        %v1376 = vmul.f32 %v964, 0.705235
        %v1377 = vmul.f32 %v996, 0.705235
        %v1378 = vmul.f32 %v965, 0.705235
        %v1379 = vmul.f32 %v997, 0.705235
        %v1380 = vmul.f32 %v966, 0.705235
        %v1381 = vmul.f32 %v998, 0.705235
        %v1382 = vmul.f32 %v967, 0.705235
        %v1383 = vmul.f32 %v999, 0.705235
        %v1384 = vmul.f32 %v968, 0.705235
        %v1385 = vmul.f32 %v1000, 0.705235
        %v1386 = vmul.f32 %v969, 0.705235
        %v1387 = vmul.f32 %v1001, 0.705235
        %1420 = vrot.lane.b32.xlu0 %v1356, 125
        %v1421 = vpop.permute.xlu0 %1420
        %1422 = vrot.lane.b32.xlu0 %v1357, 125
        %v1423 = vpop.permute.xlu0 %1422
        %1424 = vrot.lane.b32.xlu0 %v1358, 125
        %v1425 = vpop.permute.xlu0 %1424
        %1426 = vrot.lane.b32.xlu0 %v1359, 125
        %v1427 = vpop.permute.xlu0 %1426
        %1428 = vrot.lane.b32.xlu0 %v1360, 125
        %v1429 = vpop.permute.xlu0 %1428
        %1430 = vrot.lane.b32.xlu0 %v1361, 125
        %v1431 = vpop.permute.xlu0 %1430
        %1432 = vrot.lane.b32.xlu0 %v1362, 125
        %v1433 = vpop.permute.xlu0 %1432
        %1434 = vrot.lane.b32.xlu0 %v1363, 125
        %v1435 = vpop.permute.xlu0 %1434
        %1436 = vrot.lane.b32.xlu0 %v1364, 125
        %v1437 = vpop.permute.xlu0 %1436
        %1438 = vrot.lane.b32.xlu0 %v1365, 125
        %v1439 = vpop.permute.xlu0 %1438
        %1440 = vrot.lane.b32.xlu0 %v1366, 125
        %v1441 = vpop.permute.xlu0 %1440
        %1442 = vrot.lane.b32.xlu0 %v1367, 125
        %v1443 = vpop.permute.xlu0 %1442
        %1444 = vrot.lane.b32.xlu0 %v1368, 125
        %v1445 = vpop.permute.xlu0 %1444
        %1446 = vrot.lane.b32.xlu0 %v1369, 125
        %v1447 = vpop.permute.xlu0 %1446
        %1448 = vrot.lane.b32.xlu0 %v1370, 125
        %v1449 = vpop.permute.xlu0 %1448
        %1450 = vrot.lane.b32.xlu0 %v1371, 125
        %v1451 = vpop.permute.xlu0 %1450
        %1452 = vrot.lane.b32.xlu0 %v1372, 125
        %v1453 = vpop.permute.xlu0 %1452
        %1454 = vrot.lane.b32.xlu0 %v1373, 125
        %v1455 = vpop.permute.xlu0 %1454
        %1456 = vrot.lane.b32.xlu0 %v1374, 125
        %v1457 = vpop.permute.xlu0 %1456
        %1458 = vrot.lane.b32.xlu0 %v1375, 125
        %v1459 = vpop.permute.xlu0 %1458
        %1460 = vrot.lane.b32.xlu0 %v1376, 125
        %v1461 = vpop.permute.xlu0 %1460
        %1462 = vrot.lane.b32.xlu0 %v1377, 125
        %v1463 = vpop.permute.xlu0 %1462
        %1464 = vrot.lane.b32.xlu0 %v1378, 125
        %v1465 = vpop.permute.xlu0 %1464
        %1466 = vrot.lane.b32.xlu0 %v1379, 125
        %v1467 = vpop.permute.xlu0 %1466
        %1468 = vrot.lane.b32.xlu0 %v1380, 125
        %v1469 = vpop.permute.xlu0 %1468
        %1470 = vrot.lane.b32.xlu0 %v1381, 125
        %v1471 = vpop.permute.xlu0 %1470
        %1472 = vrot.lane.b32.xlu0 %v1382, 125
        %v1473 = vpop.permute.xlu0 %1472
        %1474 = vrot.lane.b32.xlu0 %v1383, 125
        %v1475 = vpop.permute.xlu0 %1474
        %1476 = vrot.lane.b32.xlu0 %v1384, 125
        %v1477 = vpop.permute.xlu0 %1476
        %1478 = vrot.lane.b32.xlu0 %v1385, 125
        %v1479 = vpop.permute.xlu0 %1478
        %1480 = vrot.lane.b32.xlu0 %v1386, 125
        %v1481 = vpop.permute.xlu0 %1480
        %1482 = vrot.lane.b32.xlu0 %v1387, 125
        %v1483 = vpop.permute.xlu0 %1482
        %vm1484 = vcmask 1022976
        %v1485 = vsel %vm1484, %v1421, %v1423
        %v1486 = vsel %vm1484, %v1425, %v1427
        %v1487 = vsel %vm1484, %v1429, %v1431
        %v1488 = vsel %vm1484, %v1433, %v1435
        %v1489 = vsel %vm1484, %v1437, %v1439
        %v1490 = vsel %vm1484, %v1441, %v1443
        %v1491 = vsel %vm1484, %v1445, %v1447
        %v1492 = vsel %vm1484, %v1449, %v1451
        %v1493 = vsel %vm1484, %v1453, %v1455
        %v1494 = vsel %vm1484, %v1457, %v1459
        %v1495 = vsel %vm1484, %v1461, %v1463
        %v1496 = vsel %vm1484, %v1465, %v1467
        %v1497 = vsel %vm1484, %v1469, %v1471
        %v1498 = vsel %vm1484, %v1473, %v1475
        %v1499 = vsel %vm1484, %v1477, %v1479
        %v1500 = vsel %vm1484, %v1481, %v1483
        %v1517 = vadd.f32 %v1340, %v1485
        %v1518 = vadd.f32 %v1341, %v1486
        %v1519 = vadd.f32 %v1342, %v1487
        %v1520 = vadd.f32 %v1343, %v1488
        %v1521 = vadd.f32 %v1344, %v1489
        %v1522 = vadd.f32 %v1345, %v1490
        %v1523 = vadd.f32 %v1346, %v1491
        %v1524 = vadd.f32 %v1347, %v1492
        %v1525 = vadd.f32 %v1348, %v1493
        %v1526 = vadd.f32 %v1349, %v1494
        %v1527 = vadd.f32 %v1350, %v1495
        %v1528 = vadd.f32 %v1351, %v1496
        %v1529 = vadd.f32 %v1352, %v1497
        %v1530 = vadd.f32 %v1353, %v1498
        %v1531 = vadd.f32 %v1354, %v1499
        %v1532 = vadd.f32 %v1355, %v1500
        %1533 = vrot.lane.b32.xlu0 %v1179, 124
        %v1534 = vpop.permute.xlu0 %1533
        %1535 = vrot.lane.b32.xlu0 %v1180, 124
        %v1536 = vpop.permute.xlu0 %1535
        %1537 = vrot.lane.b32.xlu0 %v1181, 124
        %v1538 = vpop.permute.xlu0 %1537
        %1539 = vrot.lane.b32.xlu0 %v1182, 124
        %v1540 = vpop.permute.xlu0 %1539
        %1541 = vrot.lane.b32.xlu0 %v1183, 124
        %v1542 = vpop.permute.xlu0 %1541
        %1543 = vrot.lane.b32.xlu0 %v1184, 124
        %v1544 = vpop.permute.xlu0 %1543
        %1545 = vrot.lane.b32.xlu0 %v1185, 124
        %v1546 = vpop.permute.xlu0 %1545
        %1547 = vrot.lane.b32.xlu0 %v1186, 124
        %v1548 = vpop.permute.xlu0 %1547
        %1549 = vrot.lane.b32.xlu0 %v1187, 124
        %v1550 = vpop.permute.xlu0 %1549
        %1551 = vrot.lane.b32.xlu0 %v1188, 124
        %v1552 = vpop.permute.xlu0 %1551
        %1553 = vrot.lane.b32.xlu0 %v1189, 124
        %v1554 = vpop.permute.xlu0 %1553
        %1555 = vrot.lane.b32.xlu0 %v1190, 124
        %v1556 = vpop.permute.xlu0 %1555
        %1557 = vrot.lane.b32.xlu0 %v1191, 124
        %v1558 = vpop.permute.xlu0 %1557
        %1559 = vrot.lane.b32.xlu0 %v1192, 124
        %v1560 = vpop.permute.xlu0 %1559
        %1561 = vrot.lane.b32.xlu0 %v1193, 124
        %v1562 = vpop.permute.xlu0 %1561
        %1563 = vrot.lane.b32.xlu0 %v1194, 124
        %v1564 = vpop.permute.xlu0 %1563
        %1565 = vrot.lane.b32.xlu0 %v1195, 124
        %v1566 = vpop.permute.xlu0 %1565
        %1567 = vrot.lane.b32.xlu0 %v1196, 124
        %v1568 = vpop.permute.xlu0 %1567
        %1569 = vrot.lane.b32.xlu0 %v1197, 124
        %v1570 = vpop.permute.xlu0 %1569
        %1571 = vrot.lane.b32.xlu0 %v1198, 124
        %v1572 = vpop.permute.xlu0 %1571
        %1573 = vrot.lane.b32.xlu0 %v1199, 124
        %v1574 = vpop.permute.xlu0 %1573
        %1575 = vrot.lane.b32.xlu0 %v1200, 124
        %v1576 = vpop.permute.xlu0 %1575
        %1577 = vrot.lane.b32.xlu0 %v1201, 124
        %v1578 = vpop.permute.xlu0 %1577
        %1579 = vrot.lane.b32.xlu0 %v1202, 124
        %v1580 = vpop.permute.xlu0 %1579
        %1581 = vrot.lane.b32.xlu0 %v1203, 124
        %v1582 = vpop.permute.xlu0 %1581
        %1583 = vrot.lane.b32.xlu0 %v1204, 124
        %v1584 = vpop.permute.xlu0 %1583
        %1585 = vrot.lane.b32.xlu0 %v1205, 124
        %v1586 = vpop.permute.xlu0 %1585
        %1587 = vrot.lane.b32.xlu0 %v1206, 124
        %v1588 = vpop.permute.xlu0 %1587
        %1589 = vrot.lane.b32.xlu0 %v1207, 124
        %v1590 = vpop.permute.xlu0 %1589
        %1591 = vrot.lane.b32.xlu0 %v1208, 124
        %v1592 = vpop.permute.xlu0 %1591
        %1593 = vrot.lane.b32.xlu0 %v1209, 124
        %v1594 = vpop.permute.xlu0 %1593
        %1595 = vrot.lane.b32.xlu0 %v1210, 124
        %v1596 = vpop.permute.xlu0 %1595
        %vm1597 = vcmask 1014784
        %v1598 = vsel %vm1597, %v1534, %v1536
        %v1599 = vsel %vm1597, %v1538, %v1540
        %v1600 = vsel %vm1597, %v1542, %v1544
        %v1601 = vsel %vm1597, %v1546, %v1548
        %v1602 = vsel %vm1597, %v1550, %v1552
        %v1603 = vsel %vm1597, %v1554, %v1556
        %v1604 = vsel %vm1597, %v1558, %v1560
        %v1605 = vsel %vm1597, %v1562, %v1564
        %v1606 = vsel %vm1597, %v1566, %v1568
        %v1607 = vsel %vm1597, %v1570, %v1572
        %v1608 = vsel %vm1597, %v1574, %v1576
        %v1609 = vsel %vm1597, %v1578, %v1580
        %v1610 = vsel %vm1597, %v1582, %v1584
        %v1611 = vsel %vm1597, %v1586, %v1588
        %v1612 = vsel %vm1597, %v1590, %v1592
        %v1613 = vsel %vm1597, %v1594, %v1596
        %v1630 = vadd.f32 %v1517, %v1598
        %v1631 = vadd.f32 %v1518, %v1599
        %v1632 = vadd.f32 %v1519, %v1600
        %v1633 = vadd.f32 %v1520, %v1601
        %v1634 = vadd.f32 %v1521, %v1602
        %v1635 = vadd.f32 %v1522, %v1603
        %v1636 = vadd.f32 %v1523, %v1604
        %v1637 = vadd.f32 %v1524, %v1605
        %v1638 = vadd.f32 %v1525, %v1606
        %v1639 = vadd.f32 %v1526, %v1607
        %v1640 = vadd.f32 %v1527, %v1608
        %v1641 = vadd.f32 %v1528, %v1609
        %v1642 = vadd.f32 %v1529, %v1610
        %v1643 = vadd.f32 %v1530, %v1611
        %v1644 = vadd.f32 %v1531, %v1612
        %v1645 = vadd.f32 %v1532, %v1613
        %1646 = vrot.lane.b32.xlu0 %v1002, 123
        %v1647 = vpop.permute.xlu0 %1646
        %1648 = vrot.lane.b32.xlu0 %v1003, 123
        %v1649 = vpop.permute.xlu0 %1648
        %1650 = vrot.lane.b32.xlu0 %v1004, 123
        %v1651 = vpop.permute.xlu0 %1650
        %1652 = vrot.lane.b32.xlu0 %v1005, 123
        %v1653 = vpop.permute.xlu0 %1652
        %1654 = vrot.lane.b32.xlu0 %v1006, 123
        %v1655 = vpop.permute.xlu0 %1654
        %1656 = vrot.lane.b32.xlu0 %v1007, 123
        %v1657 = vpop.permute.xlu0 %1656
        %1658 = vrot.lane.b32.xlu0 %v1008, 123
        %v1659 = vpop.permute.xlu0 %1658
        %1660 = vrot.lane.b32.xlu0 %v1009, 123
        %v1661 = vpop.permute.xlu0 %1660
        %1662 = vrot.lane.b32.xlu0 %v1010, 123
        %v1663 = vpop.permute.xlu0 %1662
        %1664 = vrot.lane.b32.xlu0 %v1011, 123
        %v1665 = vpop.permute.xlu0 %1664
        %1666 = vrot.lane.b32.xlu0 %v1012, 123
        %v1667 = vpop.permute.xlu0 %1666
        %1668 = vrot.lane.b32.xlu0 %v1013, 123
        %v1669 = vpop.permute.xlu0 %1668
        %1670 = vrot.lane.b32.xlu0 %v1014, 123
        %v1671 = vpop.permute.xlu0 %1670
        %1672 = vrot.lane.b32.xlu0 %v1015, 123
        %v1673 = vpop.permute.xlu0 %1672
        %1674 = vrot.lane.b32.xlu0 %v1016, 123
        %v1675 = vpop.permute.xlu0 %1674
        %1676 = vrot.lane.b32.xlu0 %v1017, 123
        %v1677 = vpop.permute.xlu0 %1676
        %1678 = vrot.lane.b32.xlu0 %v1018, 123
        %v1679 = vpop.permute.xlu0 %1678
        %1680 = vrot.lane.b32.xlu0 %v1019, 123
        %v1681 = vpop.permute.xlu0 %1680
        %1682 = vrot.lane.b32.xlu0 %v1020, 123
        %v1683 = vpop.permute.xlu0 %1682
        %1684 = vrot.lane.b32.xlu0 %v1021, 123
        %v1685 = vpop.permute.xlu0 %1684
        %1686 = vrot.lane.b32.xlu0 %v1022, 123
        %v1687 = vpop.permute.xlu0 %1686
        %1688 = vrot.lane.b32.xlu0 %v1023, 123
        %v1689 = vpop.permute.xlu0 %1688
        %1690 = vrot.lane.b32.xlu0 %v1024, 123
        %v1691 = vpop.permute.xlu0 %1690
        %1692 = vrot.lane.b32.xlu0 %v1025, 123
        %v1693 = vpop.permute.xlu0 %1692
        %1694 = vrot.lane.b32.xlu0 %v1026, 123
        %v1695 = vpop.permute.xlu0 %1694
        %1696 = vrot.lane.b32.xlu0 %v1027, 123
        %v1697 = vpop.permute.xlu0 %1696
        %1698 = vrot.lane.b32.xlu0 %v1028, 123
        %v1699 = vpop.permute.xlu0 %1698
        %1700 = vrot.lane.b32.xlu0 %v1029, 123
        %v1701 = vpop.permute.xlu0 %1700
        %1702 = vrot.lane.b32.xlu0 %v1030, 123
        %v1703 = vpop.permute.xlu0 %1702
        %1704 = vrot.lane.b32.xlu0 %v1031, 123
        %v1705 = vpop.permute.xlu0 %1704
        %1706 = vrot.lane.b32.xlu0 %v1032, 123
        %v1707 = vpop.permute.xlu0 %1706
        %1708 = vrot.lane.b32.xlu0 %v1033, 123
        %v1709 = vpop.permute.xlu0 %1708
        %vm1710 = vcmask 1006592
        %v1711 = vsel %vm1710, %v1647, %v1649
        %v1712 = vsel %vm1710, %v1651, %v1653
        %v1713 = vsel %vm1710, %v1655, %v1657
        %v1714 = vsel %vm1710, %v1659, %v1661
        %v1715 = vsel %vm1710, %v1663, %v1665
        %v1716 = vsel %vm1710, %v1667, %v1669
        %v1717 = vsel %vm1710, %v1671, %v1673
        %v1718 = vsel %vm1710, %v1675, %v1677
        %v1719 = vsel %vm1710, %v1679, %v1681
        %v1720 = vsel %vm1710, %v1683, %v1685
        %v1721 = vsel %vm1710, %v1687, %v1689
        %v1722 = vsel %vm1710, %v1691, %v1693
        %v1723 = vsel %vm1710, %v1695, %v1697
        %v1724 = vsel %vm1710, %v1699, %v1701
        %v1725 = vsel %vm1710, %v1703, %v1705
        %v1726 = vsel %vm1710, %v1707, %v1709
        %v1743 = vadd.f32 %v1630, %v1711
        %v1744 = vadd.f32 %v1631, %v1712
        %v1745 = vadd.f32 %v1632, %v1713
        %v1746 = vadd.f32 %v1633, %v1714
        %v1747 = vadd.f32 %v1634, %v1715
        %v1748 = vadd.f32 %v1635, %v1716
        %v1749 = vadd.f32 %v1636, %v1717
        %v1750 = vadd.f32 %v1637, %v1718
        %v1751 = vadd.f32 %v1638, %v1719
        %v1752 = vadd.f32 %v1639, %v1720
        %v1753 = vadd.f32 %v1640, %v1721
        %v1754 = vadd.f32 %v1641, %v1722
        %v1755 = vadd.f32 %v1642, %v1723
        %v1756 = vadd.f32 %v1643, %v1724
        %v1757 = vadd.f32 %v1644, %v1725
        %v1758 = vadd.f32 %v1645, %v1726
        %v1759 = vmul.f32 %v986, 0.00062330527
        %v1760 = vmul.f32 %v987, 0.00062330527
        %v1761 = vmul.f32 %v988, 0.00062330527
        %v1762 = vmul.f32 %v989, 0.00062330527
        %v1763 = vmul.f32 %v990, 0.00062330527
        %v1764 = vmul.f32 %v991, 0.00062330527
        %v1765 = vmul.f32 %v992, 0.00062330527
        %v1766 = vmul.f32 %v993, 0.00062330527
        %v1767 = vmul.f32 %v994, 0.00062330527
        %v1768 = vmul.f32 %v995, 0.00062330527
        %v1769 = vmul.f32 %v996, 0.00062330527
        %v1770 = vmul.f32 %v997, 0.00062330527
        %v1771 = vmul.f32 %v998, 0.00062330527
        %v1772 = vmul.f32 %v999, 0.00062330527
        %v1773 = vmul.f32 %v1000, 0.00062330527
        %v1774 = vmul.f32 %v1001, 0.00062330527
        %1807 = vrot.lane.b32.xlu0 %v970, 122
        %v1808 = vpop.permute.xlu0 %1807
        %1809 = vrot.lane.b32.xlu0 %v1759, 122
        %v1810 = vpop.permute.xlu0 %1809
        %1811 = vrot.lane.b32.xlu0 %v971, 122
        %v1812 = vpop.permute.xlu0 %1811
        %1813 = vrot.lane.b32.xlu0 %v1760, 122
        %v1814 = vpop.permute.xlu0 %1813
        %1815 = vrot.lane.b32.xlu0 %v972, 122
        %v1816 = vpop.permute.xlu0 %1815
        %1817 = vrot.lane.b32.xlu0 %v1761, 122
        %v1818 = vpop.permute.xlu0 %1817
        %1819 = vrot.lane.b32.xlu0 %v973, 122
        %v1820 = vpop.permute.xlu0 %1819
        %1821 = vrot.lane.b32.xlu0 %v1762, 122
        %v1822 = vpop.permute.xlu0 %1821
        %1823 = vrot.lane.b32.xlu0 %v974, 122
        %v1824 = vpop.permute.xlu0 %1823
        %1825 = vrot.lane.b32.xlu0 %v1763, 122
        %v1826 = vpop.permute.xlu0 %1825
        %1827 = vrot.lane.b32.xlu0 %v975, 122
        %v1828 = vpop.permute.xlu0 %1827
        %1829 = vrot.lane.b32.xlu0 %v1764, 122
        %v1830 = vpop.permute.xlu0 %1829
        %1831 = vrot.lane.b32.xlu0 %v976, 122
        %v1832 = vpop.permute.xlu0 %1831
        %1833 = vrot.lane.b32.xlu0 %v1765, 122
        %v1834 = vpop.permute.xlu0 %1833
        %1835 = vrot.lane.b32.xlu0 %v977, 122
        %v1836 = vpop.permute.xlu0 %1835
        %1837 = vrot.lane.b32.xlu0 %v1766, 122
        %v1838 = vpop.permute.xlu0 %1837
        %1839 = vrot.lane.b32.xlu0 %v978, 122
        %v1840 = vpop.permute.xlu0 %1839
        %1841 = vrot.lane.b32.xlu0 %v1767, 122
        %v1842 = vpop.permute.xlu0 %1841
        %1843 = vrot.lane.b32.xlu0 %v979, 122
        %v1844 = vpop.permute.xlu0 %1843
        %1845 = vrot.lane.b32.xlu0 %v1768, 122
        %v1846 = vpop.permute.xlu0 %1845
        %1847 = vrot.lane.b32.xlu0 %v980, 122
        %v1848 = vpop.permute.xlu0 %1847
        %1849 = vrot.lane.b32.xlu0 %v1769, 122
        %v1850 = vpop.permute.xlu0 %1849
        %1851 = vrot.lane.b32.xlu0 %v981, 122
        %v1852 = vpop.permute.xlu0 %1851
        %1853 = vrot.lane.b32.xlu0 %v1770, 122
        %v1854 = vpop.permute.xlu0 %1853
        %1855 = vrot.lane.b32.xlu0 %v982, 122
        %v1856 = vpop.permute.xlu0 %1855
        %1857 = vrot.lane.b32.xlu0 %v1771, 122
        %v1858 = vpop.permute.xlu0 %1857
        %1859 = vrot.lane.b32.xlu0 %v983, 122
        %v1860 = vpop.permute.xlu0 %1859
        %1861 = vrot.lane.b32.xlu0 %v1772, 122
        %v1862 = vpop.permute.xlu0 %1861
        %1863 = vrot.lane.b32.xlu0 %v984, 122
        %v1864 = vpop.permute.xlu0 %1863
        %1865 = vrot.lane.b32.xlu0 %v1773, 122
        %v1866 = vpop.permute.xlu0 %1865
        %1867 = vrot.lane.b32.xlu0 %v985, 122
        %v1868 = vpop.permute.xlu0 %1867
        %1869 = vrot.lane.b32.xlu0 %v1774, 122
        %v1870 = vpop.permute.xlu0 %1869
        %vm1871 = vcmask 998400
        %v1872 = vsel %vm1871, %v1808, %v1810
        %v1873 = vsel %vm1871, %v1812, %v1814
        %v1874 = vsel %vm1871, %v1816, %v1818
        %v1875 = vsel %vm1871, %v1820, %v1822
        %v1876 = vsel %vm1871, %v1824, %v1826
        %v1877 = vsel %vm1871, %v1828, %v1830
        %v1878 = vsel %vm1871, %v1832, %v1834
        %v1879 = vsel %vm1871, %v1836, %v1838
        %v1880 = vsel %vm1871, %v1840, %v1842
        %v1881 = vsel %vm1871, %v1844, %v1846
        %v1882 = vsel %vm1871, %v1848, %v1850
        %v1883 = vsel %vm1871, %v1852, %v1854
        %v1884 = vsel %vm1871, %v1856, %v1858
        %v1885 = vsel %vm1871, %v1860, %v1862
        %v1886 = vsel %vm1871, %v1864, %v1866
        %v1887 = vsel %vm1871, %v1868, %v1870
        %v1904 = vadd.f32 %v1743, %v1872
        %v1905 = vadd.f32 %v1744, %v1873
        %v1906 = vadd.f32 %v1745, %v1874
        %v1907 = vadd.f32 %v1746, %v1875
        %v1908 = vadd.f32 %v1747, %v1876
        %v1909 = vadd.f32 %v1748, %v1877
        %v1910 = vadd.f32 %v1749, %v1878
        %v1911 = vadd.f32 %v1750, %v1879
        %v1912 = vadd.f32 %v1751, %v1880
        %v1913 = vadd.f32 %v1752, %v1881
        %v1914 = vadd.f32 %v1753, %v1882
        %v1915 = vadd.f32 %v1754, %v1883
        %v1916 = vadd.f32 %v1755, %v1884
        %v1917 = vadd.f32 %v1756, %v1885
        %v1918 = vadd.f32 %v1757, %v1886
        %v1919 = vadd.f32 %v1758, %v1887
        %v1920 = vmul.f32 %v1904, 2.0
        %v1921 = vmul.f32 %v1905, 2.0
        %v1922 = vmul.f32 %v1906, 2.0
        %v1923 = vmul.f32 %v1907, 2.0
        %v1924 = vmul.f32 %v1908, 2.0
        %v1925 = vmul.f32 %v1909, 2.0
        %v1926 = vmul.f32 %v1910, 2.0
        %v1927 = vmul.f32 %v1911, 2.0
        %v1928 = vmul.f32 %v1912, 2.0
        %v1929 = vmul.f32 %v1913, 2.0
        %v1930 = vmul.f32 %v1914, 2.0
        %v1931 = vmul.f32 %v1915, 2.0
        %v1932 = vmul.f32 %v1916, 2.0
        %v1933 = vmul.f32 %v1917, 2.0
        %v1934 = vmul.f32 %v1918, 2.0
        %v1935 = vmul.f32 %v1919, 2.0
        %v1936 = vsub.f32 %v1920, 3.0
        %v1937 = vsub.f32 %v1921, 3.0
        %v1938 = vsub.f32 %v1922, 3.0
        %v1939 = vsub.f32 %v1923, 3.0
        %v1940 = vsub.f32 %v1924, 3.0
        %v1941 = vsub.f32 %v1925, 3.0
        %v1942 = vsub.f32 %v1926, 3.0
        %v1943 = vsub.f32 %v1927, 3.0
        %v1944 = vsub.f32 %v1928, 3.0
        %v1945 = vsub.f32 %v1929, 3.0
        %v1946 = vsub.f32 %v1930, 3.0
        %v1947 = vsub.f32 %v1931, 3.0
        %v1948 = vsub.f32 %v1932, 3.0
        %v1949 = vsub.f32 %v1933, 3.0
        %v1950 = vsub.f32 %v1934, 3.0
        %v1951 = vsub.f32 %v1935, 3.0
        %v1952 = vmax.f32 %v1936, -1.0
        %v1953 = vmax.f32 %v1937, -1.0
        %v1954 = vmax.f32 %v1938, -1.0
        %v1955 = vmax.f32 %v1939, -1.0
        %v1956 = vmax.f32 %v1940, -1.0
        %v1957 = vmax.f32 %v1941, -1.0
        %v1958 = vmax.f32 %v1942, -1.0
        %v1959 = vmax.f32 %v1943, -1.0
        %v1960 = vmax.f32 %v1944, -1.0
        %v1961 = vmax.f32 %v1945, -1.0
        %v1962 = vmax.f32 %v1946, -1.0
        %v1963 = vmax.f32 %v1947, -1.0
        %v1964 = vmax.f32 %v1948, -1.0
        %v1965 = vmax.f32 %v1949, -1.0
        %v1966 = vmax.f32 %v1950, -1.0
        %v1967 = vmax.f32 %v1951, -1.0
        %v1968 = vmin.f32 %v1952, 1.0
        %v1969 = vmin.f32 %v1953, 1.0
        %v1970 = vmin.f32 %v1954, 1.0
        %v1971 = vmin.f32 %v1955, 1.0
        %v1972 = vmin.f32 %v1956, 1.0
        %v1973 = vmin.f32 %v1957, 1.0
        %v1974 = vmin.f32 %v1958, 1.0
        %v1975 = vmin.f32 %v1959, 1.0
        %v1976 = vmin.f32 %v1960, 1.0
        %v1977 = vmin.f32 %v1961, 1.0
        %v1978 = vmin.f32 %v1962, 1.0
        %v1979 = vmin.f32 %v1963, 1.0
        %v1980 = vmin.f32 %v1964, 1.0
        %v1981 = vmin.f32 %v1965, 1.0
        %v1982 = vmin.f32 %v1966, 1.0
        %v1983 = vmin.f32 %v1967, 1.0
        %1984 = vst [vmem:[%s135] sm:$0xff] %v1968
        %1985 = vst [vmem:[%s135 + $0x8] sm:$0xff] %v1969
        %1986 = vst [vmem:[%s135 + $0x10] sm:$0xff] %v1970
        %1987 = vst [vmem:[%s135 + $0x18] sm:$0xff] %v1971
        %1988 = vst [vmem:[%s135 + $0x20] sm:$0xff] %v1972
        %1989 = vst [vmem:[%s135 + $0x28] sm:$0xff] %v1973
        %1990 = vst [vmem:[%s135 + $0x30] sm:$0xff] %v1974
        %1991 = vst [vmem:[%s135 + $0x38] sm:$0xff] %v1975
        %1992 = vst [vmem:[%s135 + $0x40] sm:$0xff] %v1976
        %1993 = vst [vmem:[%s135 + $0x48] sm:$0xff] %v1977
        %1994 = vst [vmem:[%s135 + $0x50] sm:$0xff] %v1978
        %1995 = vst [vmem:[%s135 + $0x58] sm:$0xff] %v1979
        %1996 = vst [vmem:[%s135 + $0x60] sm:$0xff] %v1980
        %1997 = vst [vmem:[%s135 + $0x68] sm:$0xff] %v1981
        %1998 = vst [vmem:[%s135 + $0x70] sm:$0xff] %v1982
        %1999 = vst [vmem:[%s135 + $0x78] sm:$0xff] %v1983
        %s2000 = sand.u32 %s52, 1
        %s2001 = scalar_lea.sflag [#allocation6], %s2000
        %s2002 = sand.u32 %s52, 1
        %s2003 = smul.addr %s2002, 128
        %s2004 = scalar_lea.vmem [#allocation7], %s2003
        // Predicated region
        $region29: #{tpu_custom_call.1} parent=23 // pred_check
          %p2005 = pneg %p62
        $region30: #{tpu_custom_call.1} parent=23 // pred_check_branch
          %2007 = sbr.rel (%p2005) target = $region32
        $region31: #{tpu_custom_call.1} parent=23 // pred_region
          %s2008 = smul.u32 2, %s18
          %s2010 = ssub.s32 2048, 2048
          %2011 = vsyncadd %s2001, %s2010
          %s2012 = smul.addr %s2008, 8
          %s2013 = smul.addr %s2012, 128
          %s2014 = scalar_lea.hbm %s1, %s2013
          %s2015 = sshll.u32 %s2004, 4
          %s2016 = int_to_ptr.vmem [resolvable:$true] %s2015
          %2021 = dma.vmem_to_hbm [thread:$0]  %s2016, 2048, %s2014, %s2001, 128, 128, 8
        $region32: #{tpu_custom_call.1} parent=23 // pred_fallthru
          _
      $region24: #{tpu_custom_call.1} parent=5 // pred_fallthru
        _
      %p2022 = scmp.le.s32.totalorder 2, %s13
      // Predicated region
      $region33: #{tpu_custom_call.1} parent=5 // pred_check
        %p2023 = pneg %p2022
      $region34: #{tpu_custom_call.1} parent=5 // pred_check_branch
        %2025 = sbr.rel (%p2023) target = $region36
      $region35: #{tpu_custom_call.1} parent=5 // pred_region
        %s2026 = ssub.s32 %s13, 2
        // Predicated region
        $region37: #{tpu_custom_call.1} parent=35 // pred_check
          %p2027 = pneg %p68
        $region38: #{tpu_custom_call.1} parent=35 // pred_check_branch
          %2029 = sbr.rel (%p2027) target = $region40
        $region39: #{tpu_custom_call.1} parent=35 // pred_region
          %s2030 = sand.u32 %s53, 1
          %s2031 = scalar_lea.sflag [#allocation6], %s2030
          %s2032 = sand.u32 %s53, 1
          %s2033 = smul.addr %s2032, 128
          %s2034 = scalar_lea.vmem [#allocation7], %s2033
          %2035 = dma.done %s2031, 2048
        $region40: #{tpu_custom_call.1} parent=35 // pred_fallthru
          _
      $region36: #{tpu_custom_call.1} parent=5 // pred_fallthru
        _
    $region6: #{tpu_custom_call.1} parent=1 // loop_footer
      %s17 = sadd.s32 1, %s13
    $region7: #{tpu_custom_call.1} parent=1 // loop_footer_branch
      %12 = sbr.rel target = $region3
    $region8: #{tpu_custom_call.1} parent=1 // loop_exit
      _
    %2036 = vsyncpa [#allocation5], 1
    %s2037 = scalar_lea.sflag [#allocation5], 1
    %2038 = vsyncpa %s2037, 1
    %2039 = vsyncpa [#allocation6], 1
    %s2040 = scalar_lea.sflag [#allocation6], 1
    %2041 = vsyncpa %s2040, 1

</llo_original>
